<compile_context>
chip_gen: v5e
topology: v5e:2x2
jax: 0.10.0
libtpu: 0.0.40
codegen_flags: <defaults>
</compile_context>

<pallas_src>
import functools
import math

import jax
import jax.numpy as jnp
from jax.experimental import pallas as pl
from jax.experimental.pallas import tpu as pltpu


# ---------------------------------------------------------------------------
# Fused kernel: one grid step handles one batch element (both attentions).
# ---------------------------------------------------------------------------
def _cross_modal_kernel(img_ref, cross_ref, text_ref,
                        wq1, wkv1, bq1, bkv1, wo1, bo1,
                        wqv2, wk2, bqv2, bk2, wo2, bo2,
                        rimg_ref, rtext_ref, att1_ref, att2_ref,
                        *, num_heads, scale):
    eimg = img_ref[...] + cross_ref[...]                     # (Lq, E) fused residual add
    text = text_ref[...]                                     # (Lk, E)
    Lq, E = eimg.shape
    H = num_heads
    Dh = E // H

    def split_heads(x):                                      # (L, E) -> (H, L, Dh)
        L = x.shape[0]
        return jnp.transpose(x.reshape(L, H, Dh), (1, 0, 2))

    def merge_heads(x):                                      # (H, L, Dh) -> (L, E)
        L = x.shape[1]
        return jnp.transpose(x, (1, 0, 2)).reshape(L, E)

    def attention(qh, kh, vh):
        # Batched over heads: 2 MXU pushes total instead of 2*H tiny ones.
        s = jnp.einsum('hqd,hkd->hqk', qh, kh,
                       preferred_element_type=jnp.float32)   # (H, Lq, Lk)
        s = s - jnp.max(s, axis=-1, keepdims=True)
        e = jnp.exp(s)
        p = e / jnp.sum(e, axis=-1, keepdims=True)           # exact softmax (torch parity)
        ctx = jnp.einsum('hqk,hkd->hqd', p, vh,
                         preferred_element_type=jnp.float32)  # (H, Lq, Dh)
        return ctx, jnp.mean(p, axis=0)                       # head-averaged weights

    # ---- MHA 1: query = eimg, key = value = text ----------------------------------
    q1 = (jnp.dot(eimg, wq1[...], preferred_element_type=jnp.float32) + bq1[...]) * scale
    kv1 = jnp.dot(text, wkv1[...], preferred_element_type=jnp.float32) + bkv1[...]
    k1 = kv1[:, :E]
    v1 = kv1[:, E:]
    ctx1, att1 = attention(split_heads(q1), split_heads(k1), split_heads(v1))
    rtext = jnp.dot(merge_heads(ctx1), wo1[...],
                    preferred_element_type=jnp.float32) + bo1[...]       # (Lq, E)
    rtext_ref[...] = rtext.astype(rtext_ref.dtype)
    att1_ref[...] = att1

    # ---- MHA 2: query = eimg, key = refined_text, value = eimg ---------------------
    qv2 = jnp.dot(eimg, wqv2[...], preferred_element_type=jnp.float32) + bqv2[...]
    q2 = qv2[:, :E] * scale
    v2 = qv2[:, E:]
    k2 = jnp.dot(rtext, wk2[...], preferred_element_type=jnp.float32) + bk2[...]
    ctx2, att2 = attention(split_heads(q2), split_heads(k2), split_heads(v2))
    rimg = jnp.dot(merge_heads(ctx2), wo2[...],
                   preferred_element_type=jnp.float32) + bo2[...]        # (Lq, E)
    rimg_ref[...] = rimg.astype(rimg_ref.dtype)
    att2_ref[...] = att2


# ---------------------------------------------------------------------------
# Weight pre-arrangement (once, outside the kernel, on tiny arrays).
# PyTorch in_proj_weight rows: [0:E]=Q, [E:2E]=K, [2E:3E]=V; Linear does x @ W.T + b.
# ---------------------------------------------------------------------------
def _arrange_mha1(p):
    in_w, in_b, out_w, out_b = p
    E = out_w.shape[0]
    wq = jnp.transpose(in_w[0:E])                                          # (E, E)
    wkv = jnp.concatenate([jnp.transpose(in_w[E:2 * E]),
                           jnp.transpose(in_w[2 * E:3 * E])], axis=1)      # (E, 2E)
    bq = in_b[0:E].reshape(1, E)
    bkv = jnp.concatenate([in_b[E:2 * E], in_b[2 * E:3 * E]]).reshape(1, 2 * E)
    wo = jnp.transpose(out_w)                                              # (E, E)
    bo = out_b.reshape(1, E)
    return wq, wkv, bq, bkv, wo, bo


def _arrange_mha2(p):
    in_w, in_b, out_w, out_b = p
    E = out_w.shape[0]
    wqv = jnp.concatenate([jnp.transpose(in_w[0:E]),
                           jnp.transpose(in_w[2 * E:3 * E])], axis=1)      # (E, 2E) Q|V
    wk = jnp.transpose(in_w[E:2 * E])                                      # (E, E)
    bqv = jnp.concatenate([in_b[0:E], in_b[2 * E:3 * E]]).reshape(1, 2 * E)
    bk = in_b[E:2 * E].reshape(1, E)
    wo = jnp.transpose(out_w)
    bo = out_b.reshape(1, E)
    return wqv, wk, bqv, bk, wo, bo


# ---------------------------------------------------------------------------
# CrossModalAttention forward (batch-first (B, S, E) in / out).
# ---------------------------------------------------------------------------
def cross_modal_attention(img_features, text_features, cross_embed, params, num_heads,
                          pad_mask=None, att_mask=None):
    # TODO(synk): key_padding_mask / attn_mask not implemented (module default is None).
    assert pad_mask is None and att_mask is None

    B, Lq, E = img_features.shape
    Lk = text_features.shape[1]
    Dh = E // num_heads
    scale = 1.0 / math.sqrt(Dh)

    w1 = _arrange_mha1(params["i2t"])
    w2 = _arrange_mha2(params["t2i"])

    kernel = functools.partial(_cross_modal_kernel, num_heads=num_heads, scale=scale)

    in_specs = [
        pl.BlockSpec((None, Lq, E), lambda b: (b, 0, 0)),   # img
        pl.BlockSpec((None, Lq, E), lambda b: (b, 0, 0)),   # cross
        pl.BlockSpec((None, Lk, E), lambda b: (b, 0, 0)),   # text
    ] + [pl.BlockSpec(w.shape, lambda b: (0, 0)) for w in (*w1, *w2)]   # all weights 2-D

    out_specs = (
        pl.BlockSpec((None, Lq, E), lambda b: (b, 0, 0)),   # refined_img
        pl.BlockSpec((None, Lq, E), lambda b: (b, 0, 0)),   # refined_text
        pl.BlockSpec((None, Lq, Lk), lambda b: (b, 0, 0)),  # att_1 (head-averaged)
        pl.BlockSpec((None, Lq, Lq), lambda b: (b, 0, 0)),  # att_2 (head-averaged)
    )

    refined_img, refined_text, att_1, att_2 = pl.pallas_call(
        kernel,
        grid=(B,),
        out_shape=(
            jax.ShapeDtypeStruct((B, Lq, E), img_features.dtype),
            jax.ShapeDtypeStruct((B, Lq, E), img_features.dtype),
            jax.ShapeDtypeStruct((B, Lq, Lk), jnp.float32),
            jax.ShapeDtypeStruct((B, Lq, Lq), jnp.float32),
        ),
        in_specs=in_specs,
        out_specs=out_specs,
        compiler_params=pltpu.CompilerParams(dimension_semantics=("parallel",)),
    )(img_features, cross_embed, text_features, *w1, *w2)

    return refined_img, refined_text, att_1, att_2


# ---------------------------------------------------------------------------
# Deterministic parameter init (shapes per nn.MultiheadAttention.__init__).
# ---------------------------------------------------------------------------
def init_mha_params(key, embed_dim):
    k1, k2 = jax.random.split(key)
    bound = 1.0 / math.sqrt(embed_dim)
    in_w = jax.random.uniform(k1, (3 * embed_dim, embed_dim), jnp.float32, -bound, bound)
    in_b = jnp.zeros((3 * embed_dim,), jnp.float32)
    out_w = jax.random.uniform(k2, (embed_dim, embed_dim), jnp.float32, -bound, bound)
    out_b = jnp.zeros((embed_dim,), jnp.float32)
    return (in_w, in_b, out_w, out_b)


def init_params(key, embed_dim):
    k1, k2 = jax.random.split(key)
    # Note: the module's self.normalize (LayerNorm) is never used in forward(), so omitted.
    return {"i2t": init_mha_params(k1, embed_dim),
            "t2i": init_mha_params(k2, embed_dim)}


if __name__ == "__main__":
    B, Lq, Lk, E, H = 2, 8, 8, 32, 4

    key = jax.random.PRNGKey(0)
    k_img, k_txt, k_cross, k_params = jax.random.split(key, 4)
    img_features = jax.random.normal(k_img, (B, Lq, E), jnp.float32)
    text_features = jax.random.normal(k_txt, (B, Lk, E), jnp.float32)
    cross_embed = jax.random.normal(k_cross, (B, Lq, E), jnp.float32)
    params = init_params(k_params, E)

    outs = cross_modal_attention(img_features, text_features, cross_embed, params, H)
    jax.block_until_ready(outs)

    refined_img, refined_text, att_1, att_2 = outs
    assert refined_img.shape == (B, Lq, E)
    assert refined_text.shape == (B, Lq, E)
    assert att_1.shape == (B, Lq, Lk)
    assert att_2.shape == (B, Lq, Lq)
    print("KERNEL_OK")
</pallas_src>

<mosaic_0001>
module attributes {stable_mosaic.version = 11 : i64} {
  func.func @_cross_modal_kernel(%arg0: i32, %arg1: memref<1x8x32xf32, #tpu.memory_space<vmem>>, %arg2: memref<1x8x32xf32, #tpu.memory_space<vmem>>, %arg3: memref<1x8x32xf32, #tpu.memory_space<vmem>>, %arg4: memref<32x32xf32, #tpu.memory_space<vmem>>, %arg5: memref<32x64xf32, #tpu.memory_space<vmem>>, %arg6: memref<1x32xf32, #tpu.memory_space<vmem>>, %arg7: memref<1x64xf32, #tpu.memory_space<vmem>>, %arg8: memref<32x32xf32, #tpu.memory_space<vmem>>, %arg9: memref<1x32xf32, #tpu.memory_space<vmem>>, %arg10: memref<32x64xf32, #tpu.memory_space<vmem>>, %arg11: memref<32x32xf32, #tpu.memory_space<vmem>>, %arg12: memref<1x64xf32, #tpu.memory_space<vmem>>, %arg13: memref<1x32xf32, #tpu.memory_space<vmem>>, %arg14: memref<32x32xf32, #tpu.memory_space<vmem>>, %arg15: memref<1x32xf32, #tpu.memory_space<vmem>>, %arg16: memref<1x8x32xf32, #tpu.memory_space<vmem>>, %arg17: memref<1x8x32xf32, #tpu.memory_space<vmem>>, %arg18: memref<1x8x8xf32, #tpu.memory_space<vmem>>, %arg19: memref<1x8x8xf32, #tpu.memory_space<vmem>>) attributes {dimension_semantics = [#tpu.dimension_semantics<parallel>], iteration_bounds = array<i64: 2>, scalar_prefetch = 0 : i64, scratch_operands = 0 : i64, tpu.core_type = #tpu.core_type<tc>, window_params = [{transform_indices = @transform_0, window_bounds = array<i64: 1, 8, 32>}, {transform_indices = @transform_1, window_bounds = array<i64: 1, 8, 32>}, {transform_indices = @transform_2, window_bounds = array<i64: 1, 8, 32>}, {pipeline_mode = #tpu.pipeline_mode<synchronous>, transform_indices = @transform_3, window_bounds = array<i64: 32, 32>}, {pipeline_mode = #tpu.pipeline_mode<synchronous>, transform_indices = @transform_4, window_bounds = array<i64: 32, 64>}, {pipeline_mode = #tpu.pipeline_mode<synchronous>, transform_indices = @transform_5, window_bounds = array<i64: 1, 32>}, {pipeline_mode = #tpu.pipeline_mode<synchronous>, transform_indices = @transform_6, window_bounds = array<i64: 1, 64>}, {pipeline_mode = #tpu.pipeline_mode<synchronous>, transform_indices = @transform_7, window_bounds = array<i64: 32, 32>}, {pipeline_mode = #tpu.pipeline_mode<synchronous>, transform_indices = @transform_8, window_bounds = array<i64: 1, 32>}, {pipeline_mode = #tpu.pipeline_mode<synchronous>, transform_indices = @transform_9, window_bounds = array<i64: 32, 64>}, {pipeline_mode = #tpu.pipeline_mode<synchronous>, transform_indices = @transform_10, window_bounds = array<i64: 32, 32>}, {pipeline_mode = #tpu.pipeline_mode<synchronous>, transform_indices = @transform_11, window_bounds = array<i64: 1, 64>}, {pipeline_mode = #tpu.pipeline_mode<synchronous>, transform_indices = @transform_12, window_bounds = array<i64: 1, 32>}, {pipeline_mode = #tpu.pipeline_mode<synchronous>, transform_indices = @transform_13, window_bounds = array<i64: 32, 32>}, {pipeline_mode = #tpu.pipeline_mode<synchronous>, transform_indices = @transform_14, window_bounds = array<i64: 1, 32>}, {transform_indices = @transform_15, window_bounds = array<i64: 1, 8, 32>}, {transform_indices = @transform_16, window_bounds = array<i64: 1, 8, 32>}, {transform_indices = @transform_17, window_bounds = array<i64: 1, 8, 8>}, {transform_indices = @transform_18, window_bounds = array<i64: 1, 8, 8>}]} {
    %c0 = arith.constant 0 : index
    %c0_0 = arith.constant 0 : index
    %c0_1 = arith.constant 0 : index
    %0 = vector.load %arg1[%c0, %c0_0, %c0_1] : memref<1x8x32xf32, #tpu.memory_space<vmem>>, vector<1x8x32xf32>
    %1 = vector.shape_cast %0 : vector<1x8x32xf32> to vector<8x32xf32>
    %c0_2 = arith.constant 0 : index
    %c0_3 = arith.constant 0 : index
    %c0_4 = arith.constant 0 : index
    %2 = vector.load %arg2[%c0_2, %c0_3, %c0_4] : memref<1x8x32xf32, #tpu.memory_space<vmem>>, vector<1x8x32xf32>
    %3 = vector.shape_cast %2 : vector<1x8x32xf32> to vector<8x32xf32>
    %4 = arith.addf %1, %3 : vector<8x32xf32>
    %c0_5 = arith.constant 0 : index
    %c0_6 = arith.constant 0 : index
    %c0_7 = arith.constant 0 : index
    %5 = vector.load %arg3[%c0_5, %c0_6, %c0_7] : memref<1x8x32xf32, #tpu.memory_space<vmem>>, vector<1x8x32xf32>
    %6 = vector.shape_cast %5 : vector<1x8x32xf32> to vector<8x32xf32>
    %c0_8 = arith.constant 0 : index
    %c0_9 = arith.constant 0 : index
    %7 = vector.load %arg4[%c0_8, %c0_9] : memref<32x32xf32, #tpu.memory_space<vmem>>, vector<32x32xf32>
    %cst = arith.constant dense<0.000000e+00> : vector<8x32xf32>
    %8 = tpu.matmul %4, %7, %cst {dimension_numbers = #tpu.dot_dimension_numbers<[1], [0], [0], [1], [0, 0, 1, 1], [], []>} : vector<8x32xf32>, vector<32x32xf32>, vector<8x32xf32> -> vector<8x32xf32>
    %c0_10 = arith.constant 0 : index
    %c0_11 = arith.constant 0 : index
    %9 = vector.load %arg6[%c0_10, %c0_11] : memref<1x32xf32, #tpu.memory_space<vmem>>, vector<1x32xf32>
    %10 = vector.broadcast %9 : vector<1x32xf32> to vector<8x32xf32>
    %11 = arith.addf %8, %10 : vector<8x32xf32>
    %cst_12 = arith.constant 0.353553385 : f32
    %12 = vector.broadcast %cst_12 : f32 to vector<8x32xf32>
    %13 = arith.mulf %11, %12 : vector<8x32xf32>
    %c0_13 = arith.constant 0 : index
    %c0_14 = arith.constant 0 : index
    %14 = vector.load %arg5[%c0_13, %c0_14] : memref<32x64xf32, #tpu.memory_space<vmem>>, vector<32x64xf32>
    %cst_15 = arith.constant dense<0.000000e+00> : vector<8x64xf32>
    %15 = tpu.matmul %6, %14, %cst_15 {dimension_numbers = #tpu.dot_dimension_numbers<[1], [0], [0], [1], [0, 0, 1, 1], [], []>} : vector<8x32xf32>, vector<32x64xf32>, vector<8x64xf32> -> vector<8x64xf32>
    %c0_16 = arith.constant 0 : index
    %c0_17 = arith.constant 0 : index
    %16 = vector.load %arg7[%c0_16, %c0_17] : memref<1x64xf32, #tpu.memory_space<vmem>>, vector<1x64xf32>
    %17 = vector.broadcast %16 : vector<1x64xf32> to vector<8x64xf32>
    %18 = arith.addf %15, %17 : vector<8x64xf32>
    %19 = vector.extract_strided_slice %18 {offsets = [0, 0], sizes = [8, 32], strides = [1, 1]} : vector<8x64xf32> to vector<8x32xf32>
    %20 = vector.extract_strided_slice %18 {offsets = [0, 32], sizes = [8, 32], strides = [1, 1]} : vector<8x64xf32> to vector<8x32xf32>
    %21 = vector.shape_cast %13 : vector<8x32xf32> to vector<8x4x8xf32>
    %22 = tpu.transpose %21, [1, 0, 2] : vector<8x4x8xf32> -> vector<4x8x8xf32>
    %23 = vector.shape_cast %19 : vector<8x32xf32> to vector<8x4x8xf32>
    %24 = tpu.transpose %23, [1, 0, 2] : vector<8x4x8xf32> -> vector<4x8x8xf32>
    %25 = vector.shape_cast %20 : vector<8x32xf32> to vector<8x4x8xf32>
    %26 = tpu.transpose %25, [1, 0, 2] : vector<8x4x8xf32> -> vector<4x8x8xf32>
    "tpu.trace_start"() <{level = 10 : i32, message = "hqd,hkd->hqk"}> : () -> ()
    %cst_18 = arith.constant dense<0.000000e+00> : vector<4x8x8xf32>
    %27 = tpu.matmul %22, %24, %cst_18 {dimension_numbers = #tpu.dot_dimension_numbers<[2], [2], [1], [1], [0, 0, 0, 1, 1, 1], [0], [0]>} : vector<4x8x8xf32>, vector<4x8x8xf32>, vector<4x8x8xf32> -> vector<4x8x8xf32>
    "tpu.trace_stop"() : () -> ()
    %cst_19 = arith.constant dense<0xFF800000> : vector<4x8xf32>
    %28 = vector.multi_reduction <maximumf>, %27, %cst_19 [2] : vector<4x8x8xf32> to vector<4x8xf32>
    %29 = vector.shape_cast %28 : vector<4x8xf32> to vector<4x8x1xf32>
    %30 = vector.broadcast %29 : vector<4x8x1xf32> to vector<4x8x8xf32>
    %31 = arith.subf %27, %30 : vector<4x8x8xf32>
    %32 = math.exp %31 : vector<4x8x8xf32>
    %cst_20 = arith.constant dense<0.000000e+00> : vector<4x8xf32>
    %33 = vector.multi_reduction <add>, %32, %cst_20 [2] : vector<4x8x8xf32> to vector<4x8xf32>
    %34 = vector.shape_cast %33 : vector<4x8xf32> to vector<4x8x1xf32>
    %35 = vector.broadcast %34 : vector<4x8x1xf32> to vector<4x8x8xf32>
    %36 = arith.divf %32, %35 : vector<4x8x8xf32>
    "tpu.trace_start"() <{level = 10 : i32, message = "hqk,hkd->hqd"}> : () -> ()
    %cst_21 = arith.constant dense<0.000000e+00> : vector<4x8x8xf32>
    %37 = tpu.matmul %36, %26, %cst_21 {dimension_numbers = #tpu.dot_dimension_numbers<[2], [1], [1], [2], [0, 0, 0, 1, 1, 2], [0], [0]>} : vector<4x8x8xf32>, vector<4x8x8xf32>, vector<4x8x8xf32> -> vector<4x8x8xf32>
    "tpu.trace_stop"() : () -> ()
    %cst_22 = arith.constant dense<0.000000e+00> : vector<8x8xf32>
    %38 = vector.multi_reduction <add>, %36, %cst_22 [0] : vector<4x8x8xf32> to vector<8x8xf32>
    %cst_23 = arith.constant 4.000000e+00 : f32
    %39 = vector.broadcast %cst_23 : f32 to vector<8x8xf32>
    %40 = arith.divf %38, %39 : vector<8x8xf32>
    %41 = tpu.transpose %37, [1, 0, 2] : vector<4x8x8xf32> -> vector<8x4x8xf32>
    %42 = vector.shape_cast %41 : vector<8x4x8xf32> to vector<8x32xf32>
    %c0_24 = arith.constant 0 : index
    %c0_25 = arith.constant 0 : index
    %43 = vector.load %arg8[%c0_24, %c0_25] : memref<32x32xf32, #tpu.memory_space<vmem>>, vector<32x32xf32>
    %cst_26 = arith.constant dense<0.000000e+00> : vector<8x32xf32>
    %44 = tpu.matmul %42, %43, %cst_26 {dimension_numbers = #tpu.dot_dimension_numbers<[1], [0], [0], [1], [0, 0, 1, 1], [], []>} : vector<8x32xf32>, vector<32x32xf32>, vector<8x32xf32> -> vector<8x32xf32>
    %c0_27 = arith.constant 0 : index
    %c0_28 = arith.constant 0 : index
    %45 = vector.load %arg9[%c0_27, %c0_28] : memref<1x32xf32, #tpu.memory_space<vmem>>, vector<1x32xf32>
    %46 = vector.broadcast %45 : vector<1x32xf32> to vector<8x32xf32>
    %47 = arith.addf %44, %46 : vector<8x32xf32>
    %c0_29 = arith.constant 0 : index
    %c0_30 = arith.constant 0 : index
    %c0_31 = arith.constant 0 : index
    %48 = vector.load %arg17[%c0_29, %c0_30, %c0_31] : memref<1x8x32xf32, #tpu.memory_space<vmem>>, vector<1x8x32xf32>
    %49 = vector.shape_cast %48 : vector<1x8x32xf32> to vector<8x32xf32>
    %50 = vector.shape_cast %47 : vector<8x32xf32> to vector<1x8x32xf32>
    tpu.vector_store %arg17[%c0_29, %c0_30, %c0_31], %50 {strides = array<i32>} : memref<1x8x32xf32, #tpu.memory_space<vmem>>, vector<1x8x32xf32>,
    %c0_32 = arith.constant 0 : index
    %c0_33 = arith.constant 0 : index
    %c0_34 = arith.constant 0 : index
    %51 = vector.load %arg18[%c0_32, %c0_33, %c0_34] : memref<1x8x8xf32, #tpu.memory_space<vmem>>, vector<1x8x8xf32>
    %52 = vector.shape_cast %51 : vector<1x8x8xf32> to vector<8x8xf32>
    %53 = vector.shape_cast %40 : vector<8x8xf32> to vector<1x8x8xf32>
    tpu.vector_store %arg18[%c0_32, %c0_33, %c0_34], %53 {strides = array<i32>} : memref<1x8x8xf32, #tpu.memory_space<vmem>>, vector<1x8x8xf32>,
    %c0_35 = arith.constant 0 : index
    %c0_36 = arith.constant 0 : index
    %54 = vector.load %arg10[%c0_35, %c0_36] : memref<32x64xf32, #tpu.memory_space<vmem>>, vector<32x64xf32>
    %cst_37 = arith.constant dense<0.000000e+00> : vector<8x64xf32>
    %55 = tpu.matmul %4, %54, %cst_37 {dimension_numbers = #tpu.dot_dimension_numbers<[1], [0], [0], [1], [0, 0, 1, 1], [], []>} : vector<8x32xf32>, vector<32x64xf32>, vector<8x64xf32> -> vector<8x64xf32>
    %c0_38 = arith.constant 0 : index
    %c0_39 = arith.constant 0 : index
    %56 = vector.load %arg12[%c0_38, %c0_39] : memref<1x64xf32, #tpu.memory_space<vmem>>, vector<1x64xf32>
    %57 = vector.broadcast %56 : vector<1x64xf32> to vector<8x64xf32>
    %58 = arith.addf %55, %57 : vector<8x64xf32>
    %59 = vector.extract_strided_slice %58 {offsets = [0, 0], sizes = [8, 32], strides = [1, 1]} : vector<8x64xf32> to vector<8x32xf32>
    %cst_40 = arith.constant 0.353553385 : f32
    %60 = vector.broadcast %cst_40 : f32 to vector<8x32xf32>
    %61 = arith.mulf %59, %60 : vector<8x32xf32>
    %62 = vector.extract_strided_slice %58 {offsets = [0, 32], sizes = [8, 32], strides = [1, 1]} : vector<8x64xf32> to vector<8x32xf32>
    %c0_41 = arith.constant 0 : index
    %c0_42 = arith.constant 0 : index
    %63 = vector.load %arg11[%c0_41, %c0_42] : memref<32x32xf32, #tpu.memory_space<vmem>>, vector<32x32xf32>
    %cst_43 = arith.constant dense<0.000000e+00> : vector<8x32xf32>
    %64 = tpu.matmul %47, %63, %cst_43 {dimension_numbers = #tpu.dot_dimension_numbers<[1], [0], [0], [1], [0, 0, 1, 1], [], []>} : vector<8x32xf32>, vector<32x32xf32>, vector<8x32xf32> -> vector<8x32xf32>
    %c0_44 = arith.constant 0 : index
    %c0_45 = arith.constant 0 : index
    %65 = vector.load %arg13[%c0_44, %c0_45] : memref<1x32xf32, #tpu.memory_space<vmem>>, vector<1x32xf32>
    %66 = vector.broadcast %65 : vector<1x32xf32> to vector<8x32xf32>
    %67 = arith.addf %64, %66 : vector<8x32xf32>
    %68 = vector.shape_cast %61 : vector<8x32xf32> to vector<8x4x8xf32>
    %69 = tpu.transpose %68, [1, 0, 2] : vector<8x4x8xf32> -> vector<4x8x8xf32>
    %70 = vector.shape_cast %67 : vector<8x32xf32> to vector<8x4x8xf32>
    %71 = tpu.transpose %70, [1, 0, 2] : vector<8x4x8xf32> -> vector<4x8x8xf32>
    %72 = vector.shape_cast %62 : vector<8x32xf32> to vector<8x4x8xf32>
    %73 = tpu.transpose %72, [1, 0, 2] : vector<8x4x8xf32> -> vector<4x8x8xf32>
    "tpu.trace_start"() <{level = 10 : i32, message = "hqd,hkd->hqk"}> : () -> ()
    %cst_46 = arith.constant dense<0.000000e+00> : vector<4x8x8xf32>
    %74 = tpu.matmul %69, %71, %cst_46 {dimension_numbers = #tpu.dot_dimension_numbers<[2], [2], [1], [1], [0, 0, 0, 1, 1, 1], [0], [0]>} : vector<4x8x8xf32>, vector<4x8x8xf32>, vector<4x8x8xf32> -> vector<4x8x8xf32>
    "tpu.trace_stop"() : () -> ()
    %cst_47 = arith.constant dense<0xFF800000> : vector<4x8xf32>
    %75 = vector.multi_reduction <maximumf>, %74, %cst_47 [2] : vector<4x8x8xf32> to vector<4x8xf32>
    %76 = vector.shape_cast %75 : vector<4x8xf32> to vector<4x8x1xf32>
    %77 = vector.broadcast %76 : vector<4x8x1xf32> to vector<4x8x8xf32>
    %78 = arith.subf %74, %77 : vector<4x8x8xf32>
    %79 = math.exp %78 : vector<4x8x8xf32>
    %cst_48 = arith.constant dense<0.000000e+00> : vector<4x8xf32>
    %80 = vector.multi_reduction <add>, %79, %cst_48 [2] : vector<4x8x8xf32> to vector<4x8xf32>
    %81 = vector.shape_cast %80 : vector<4x8xf32> to vector<4x8x1xf32>
    %82 = vector.broadcast %81 : vector<4x8x1xf32> to vector<4x8x8xf32>
    %83 = arith.divf %79, %82 : vector<4x8x8xf32>
    "tpu.trace_start"() <{level = 10 : i32, message = "hqk,hkd->hqd"}> : () -> ()
    %cst_49 = arith.constant dense<0.000000e+00> : vector<4x8x8xf32>
    %84 = tpu.matmul %83, %73, %cst_49 {dimension_numbers = #tpu.dot_dimension_numbers<[2], [1], [1], [2], [0, 0, 0, 1, 1, 2], [0], [0]>} : vector<4x8x8xf32>, vector<4x8x8xf32>, vector<4x8x8xf32> -> vector<4x8x8xf32>
    "tpu.trace_stop"() : () -> ()
    %cst_50 = arith.constant dense<0.000000e+00> : vector<8x8xf32>
    %85 = vector.multi_reduction <add>, %83, %cst_50 [0] : vector<4x8x8xf32> to vector<8x8xf32>
    %cst_51 = arith.constant 4.000000e+00 : f32
    %86 = vector.broadcast %cst_51 : f32 to vector<8x8xf32>
    %87 = arith.divf %85, %86 : vector<8x8xf32>
    %88 = tpu.transpose %84, [1, 0, 2] : vector<4x8x8xf32> -> vector<8x4x8xf32>
    %89 = vector.shape_cast %88 : vector<8x4x8xf32> to vector<8x32xf32>
    %c0_52 = arith.constant 0 : index
    %c0_53 = arith.constant 0 : index
    %90 = vector.load %arg14[%c0_52, %c0_53] : memref<32x32xf32, #tpu.memory_space<vmem>>, vector<32x32xf32>
    %cst_54 = arith.constant dense<0.000000e+00> : vector<8x32xf32>
    %91 = tpu.matmul %89, %90, %cst_54 {dimension_numbers = #tpu.dot_dimension_numbers<[1], [0], [0], [1], [0, 0, 1, 1], [], []>} : vector<8x32xf32>, vector<32x32xf32>, vector<8x32xf32> -> vector<8x32xf32>
    %c0_55 = arith.constant 0 : index
    %c0_56 = arith.constant 0 : index
    %92 = vector.load %arg15[%c0_55, %c0_56] : memref<1x32xf32, #tpu.memory_space<vmem>>, vector<1x32xf32>
    %93 = vector.broadcast %92 : vector<1x32xf32> to vector<8x32xf32>
    %94 = arith.addf %91, %93 : vector<8x32xf32>
    %c0_57 = arith.constant 0 : index
    %c0_58 = arith.constant 0 : index
    %c0_59 = arith.constant 0 : index
    %95 = vector.load %arg16[%c0_57, %c0_58, %c0_59] : memref<1x8x32xf32, #tpu.memory_space<vmem>>, vector<1x8x32xf32>
    %96 = vector.shape_cast %95 : vector<1x8x32xf32> to vector<8x32xf32>
    %97 = vector.shape_cast %94 : vector<8x32xf32> to vector<1x8x32xf32>
    tpu.vector_store %arg16[%c0_57, %c0_58, %c0_59], %97 {strides = array<i32>} : memref<1x8x32xf32, #tpu.memory_space<vmem>>, vector<1x8x32xf32>,
    %c0_60 = arith.constant 0 : index
    %c0_61 = arith.constant 0 : index
    %c0_62 = arith.constant 0 : index
    %98 = vector.load %arg19[%c0_60, %c0_61, %c0_62] : memref<1x8x8xf32, #tpu.memory_space<vmem>>, vector<1x8x8xf32>
    %99 = vector.shape_cast %98 : vector<1x8x8xf32> to vector<8x8xf32>
    %100 = vector.shape_cast %87 : vector<8x8xf32> to vector<1x8x8xf32>
    tpu.vector_store %arg19[%c0_60, %c0_61, %c0_62], %100 {strides = array<i32>} : memref<1x8x8xf32, #tpu.memory_space<vmem>>, vector<1x8x8xf32>,
    return
  }
  func.func @transform_0(%arg0: i32) -> (i32, i32, i32) {
    %c0_i32 = arith.constant 0 : i32
    %c0_i32_0 = arith.constant 0 : i32
    %c0_i32_1 = arith.constant 0 : i32
    return %arg0, %c0_i32, %c0_i32_0 : i32, i32, i32
  }
  func.func @transform_1(%arg0: i32) -> (i32, i32, i32) {
    %c0_i32 = arith.constant 0 : i32
    %c0_i32_0 = arith.constant 0 : i32
    %c0_i32_1 = arith.constant 0 : i32
    return %arg0, %c0_i32, %c0_i32_0 : i32, i32, i32
  }
  func.func @transform_2(%arg0: i32) -> (i32, i32, i32) {
    %c0_i32 = arith.constant 0 : i32
    %c0_i32_0 = arith.constant 0 : i32
    %c0_i32_1 = arith.constant 0 : i32
    return %arg0, %c0_i32, %c0_i32_0 : i32, i32, i32
  }
  func.func @transform_3(%arg0: i32) -> (i32, i32) {
    %c0_i32 = arith.constant 0 : i32
    %c0_i32_0 = arith.constant 0 : i32
    %c0_i32_1 = arith.constant 0 : i32
    return %c0_i32, %c0_i32_0 : i32, i32
  }
  func.func @transform_4(%arg0: i32) -> (i32, i32) {
    %c0_i32 = arith.constant 0 : i32
    %c0_i32_0 = arith.constant 0 : i32
    %c0_i32_1 = arith.constant 0 : i32
    return %c0_i32, %c0_i32_0 : i32, i32
  }
  func.func @transform_5(%arg0: i32) -> (i32, i32) {
    %c0_i32 = arith.constant 0 : i32
    %c0_i32_0 = arith.constant 0 : i32
    %c0_i32_1 = arith.constant 0 : i32
    return %c0_i32, %c0_i32_0 : i32, i32
  }
  func.func @transform_6(%arg0: i32) -> (i32, i32) {
    %c0_i32 = arith.constant 0 : i32
    %c0_i32_0 = arith.constant 0 : i32
    %c0_i32_1 = arith.constant 0 : i32
    return %c0_i32, %c0_i32_0 : i32, i32
  }
  func.func @transform_7(%arg0: i32) -> (i32, i32) {
    %c0_i32 = arith.constant 0 : i32
    %c0_i32_0 = arith.constant 0 : i32
    %c0_i32_1 = arith.constant 0 : i32
    return %c0_i32, %c0_i32_0 : i32, i32
  }
  func.func @transform_8(%arg0: i32) -> (i32, i32) {
    %c0_i32 = arith.constant 0 : i32
    %c0_i32_0 = arith.constant 0 : i32
    %c0_i32_1 = arith.constant 0 : i32
    return %c0_i32, %c0_i32_0 : i32, i32
  }
  func.func @transform_9(%arg0: i32) -> (i32, i32) {
    %c0_i32 = arith.constant 0 : i32
    %c0_i32_0 = arith.constant 0 : i32
    %c0_i32_1 = arith.constant 0 : i32
    return %c0_i32, %c0_i32_0 : i32, i32
  }
  func.func @transform_10(%arg0: i32) -> (i32, i32) {
    %c0_i32 = arith.constant 0 : i32
    %c0_i32_0 = arith.constant 0 : i32
    %c0_i32_1 = arith.constant 0 : i32
    return %c0_i32, %c0_i32_0 : i32, i32
  }
  func.func @transform_11(%arg0: i32) -> (i32, i32) {
    %c0_i32 = arith.constant 0 : i32
    %c0_i32_0 = arith.constant 0 : i32
    %c0_i32_1 = arith.constant 0 : i32
    return %c0_i32, %c0_i32_0 : i32, i32
  }
  func.func @transform_12(%arg0: i32) -> (i32, i32) {
    %c0_i32 = arith.constant 0 : i32
    %c0_i32_0 = arith.constant 0 : i32
    %c0_i32_1 = arith.constant 0 : i32
    return %c0_i32, %c0_i32_0 : i32, i32
  }
  func.func @transform_13(%arg0: i32) -> (i32, i32) {
    %c0_i32 = arith.constant 0 : i32
    %c0_i32_0 = arith.constant 0 : i32
    %c0_i32_1 = arith.constant 0 : i32
    return %c0_i32, %c0_i32_0 : i32, i32
  }
  func.func @transform_14(%arg0: i32) -> (i32, i32) {
    %c0_i32 = arith.constant 0 : i32
    %c0_i32_0 = arith.constant 0 : i32
    %c0_i32_1 = arith.constant 0 : i32
    return %c0_i32, %c0_i32_0 : i32, i32
  }
  func.func @transform_15(%arg0: i32) -> (i32, i32, i32) {
    %c0_i32 = arith.constant 0 : i32
    %c0_i32_0 = arith.constant 0 : i32
    %c0_i32_1 = arith.constant 0 : i32
    return %arg0, %c0_i32, %c0_i32_0 : i32, i32, i32
  }
  func.func @transform_16(%arg0: i32) -> (i32, i32, i32) {
    %c0_i32 = arith.constant 0 : i32
    %c0_i32_0 = arith.constant 0 : i32
    %c0_i32_1 = arith.constant 0 : i32
    return %arg0, %c0_i32, %c0_i32_0 : i32, i32, i32
  }
  func.func @transform_17(%arg0: i32) -> (i32, i32, i32) {
    %c0_i32 = arith.constant 0 : i32
    %c0_i32_0 = arith.constant 0 : i32
    %c0_i32_1 = arith.constant 0 : i32
    return %arg0, %c0_i32, %c0_i32_0 : i32, i32, i32
  }
  func.func @transform_18(%arg0: i32) -> (i32, i32, i32) {
    %c0_i32 = arith.constant 0 : i32
    %c0_i32_0 = arith.constant 0 : i32
    %c0_i32_1 = arith.constant 0 : i32
    return %arg0, %c0_i32, %c0_i32_0 : i32, i32, i32
  }
}

</mosaic_0001>

<llo_original>
// kernel: tpu_custom_call.1
$region0: #{tpu_custom_call.1}
  #allocation0 [shape = 'u32[]', space=smem, size = 0x4, offset = 0x4, fixed_abs, tag = 'smem constant byte address 0x4 - core index']
  #allocation1 [shape = 'u32[72,128]{1,0:T(1,128)}', space=vmem, size = 0x9000, scoped, tag = 'internal scratch']
  %s0 = inlined_call_operand.hbm [shape: f32[2,8,32], index: 0, kind: input, shape index: {}]
  %s1 = inlined_call_operand.hbm [shape: f32[2,8,32], index: 1, kind: input, shape index: {}]
  %s2 = inlined_call_operand.hbm [shape: f32[2,8,32], index: 2, kind: input, shape index: {}]
  %s3 = inlined_call_operand.hbm [shape: f32[32,32], index: 3, kind: input, shape index: {}]
  %s4 = inlined_call_operand.hbm [shape: f32[32,64], index: 4, kind: input, shape index: {}]
  %s5 = inlined_call_operand.vmem [shape: f32[1,32], index: 5, kind: input, shape index: {}]
  %s6 = inlined_call_operand.vmem [shape: f32[1,64], index: 6, kind: input, shape index: {}]
  %s7 = inlined_call_operand.hbm [shape: f32[32,32], index: 7, kind: input, shape index: {}]
  %s8 = inlined_call_operand.vmem [shape: f32[1,32], index: 8, kind: input, shape index: {}]
  %s9 = inlined_call_operand.hbm [shape: f32[32,64], index: 9, kind: input, shape index: {}]
  %s10 = inlined_call_operand.hbm [shape: f32[32,32], index: 10, kind: input, shape index: {}]
  %s11 = inlined_call_operand.vmem [shape: f32[1,64], index: 11, kind: input, shape index: {}]
  %s12 = inlined_call_operand.vmem [shape: f32[1,32], index: 12, kind: input, shape index: {}]
  %s13 = inlined_call_operand.hbm [shape: f32[32,32], index: 13, kind: input, shape index: {}]
  %s14 = inlined_call_operand.vmem [shape: f32[1,32], index: 14, kind: input, shape index: {}]
  %s15 = inlined_call_operand.hbm [shape: f32[2,8,32], index: 15, kind: output, shape index: {0}]
  %s16 = inlined_call_operand.hbm [shape: f32[2,8,32], index: 16, kind: output, shape index: {1}]
  %s17 = inlined_call_operand.hbm [shape: f32[2,8,8], index: 17, kind: output, shape index: {2}]
  %s18 = inlined_call_operand.hbm [shape: f32[2,8,8], index: 18, kind: output, shape index: {3}]
  %19 = xla_tuple %s15, %s16, %s17, %s18
  %s20 = sld [smem:[#allocation0]]
  $region153: #{tpu_custom_call.1} parent=0
    _
  %s22 = ssub.s32 1, %s20
  %s23 = scalar_select 0, %s22, %s20
  $region1: #{tpu_custom_call.1} parent=0
    #allocation2 [shape = 'u8[8192]{0}', space=vmem, size = 0x2000, scoped, tag = 'input window, operand 0']
    #allocation3 [shape = 's32[2]{0}', space=sflag, size = 0x8, scoped, tag = 'scoped memory for tpu_custom_call.1']
    #allocation4 [shape = 's32[2]{0}', space=sflag, size = 0x8, scoped, tag = 'scoped memory for tpu_custom_call.1']
    #allocation5 [shape = 'u8[8192]{0}', space=vmem, size = 0x2000, scoped, tag = 'input window, operand 1']
    #allocation6 [shape = 's32[2]{0}', space=sflag, size = 0x8, scoped, tag = 'scoped memory for tpu_custom_call.1']
    #allocation7 [shape = 'u8[8192]{0}', space=vmem, size = 0x2000, scoped, tag = 'input window, operand 2']
    #allocation8 [shape = 'u8[16384]{0}', space=vmem, size = 0x4000, scoped, tag = 'input window, operand 3, single buffered']
    #allocation9 [shape = 's32[1]{0}', space=sflag, size = 0x4, scoped, tag = 'scoped memory for tpu_custom_call.1']
    #allocation10 [shape = 'u8[16384]{0}', space=vmem, size = 0x4000, scoped, tag = 'input window, operand 4, single buffered']
    #allocation11 [shape = 'u8[16384]{0}', space=vmem, size = 0x4000, scoped, tag = 'input window, operand 7, single buffered']
    #allocation12 [shape = 's32[1]{0}', space=sflag, size = 0x4, scoped, tag = 'scoped memory for tpu_custom_call.1']
    #allocation13 [shape = 'u8[16384]{0}', space=vmem, size = 0x4000, scoped, tag = 'input window, operand 9, single buffered']
    #allocation14 [shape = 'u8[16384]{0}', space=vmem, size = 0x4000, scoped, tag = 'input window, operand 10, single buffered']
    #allocation15 [shape = 's32[1]{0}', space=sflag, size = 0x4, scoped, tag = 'scoped memory for tpu_custom_call.1']
    #allocation16 [shape = 'u8[16384]{0}', space=vmem, size = 0x4000, scoped, tag = 'input window, operand 13, single buffered']
    #allocation17 [shape = 'u8[8192]{0}', space=vmem, size = 0x2000, scoped, tag = 'output window, operand 0']
    #allocation18 [shape = 'u8[8192]{0}', space=vmem, size = 0x2000, scoped, tag = 'output window, operand 1']
    #allocation19 [shape = 's32[2]{0}', space=sflag, size = 0x8, scoped, tag = 'scoped memory for tpu_custom_call.1']
    #allocation20 [shape = 'u8[8192]{0}', space=vmem, size = 0x2000, scoped, tag = 'output window, operand 2']
    #allocation21 [shape = 'u8[8192]{0}', space=vmem, size = 0x2000, scoped, tag = 'output window, operand 3']
    #allocation22 [shape = 's32[2]{0}', space=sflag, size = 0x8, scoped, tag = 'scoped memory for tpu_custom_call.1']
    %24 = vsyncpa [#allocation3], 0
    %s25 = scalar_lea.sflag [#allocation3], 1
    %26 = vsyncpa %s25, 0
    %27 = vsyncpa [#allocation6], 0
    %s28 = scalar_lea.sflag [#allocation6], 1
    %29 = vsyncpa %s28, 0
    %30 = vsyncpa [#allocation9], 0
    %31 = vsyncpa [#allocation12], 0
    %32 = vsyncpa [#allocation15], 0
    %33 = vsyncpa [#allocation4], 0
    %s34 = scalar_lea.sflag [#allocation4], 1
    %35 = vsyncpa %s34, 0
    %36 = vsyncpa [#allocation19], 0
    %s37 = scalar_lea.sflag [#allocation19], 1
    %38 = vsyncpa %s37, 0
    %39 = vsyncpa [#allocation22], 0
    %s40 = scalar_lea.sflag [#allocation22], 1
    %41 = vsyncpa %s40, 0
    loop: start=0, step=1, limit=4
    $region2: #{tpu_custom_call.1} parent=1 // loop_pre_header
      _
    $region3: #{tpu_custom_call.1} parent=1 // loop_header
      %s43 = sphi 0, %s47
      %p44 = scmp.ge.s32.totalorder %s43, 4
      %s53 = sphi 0, %s55
      %s56 = sphi 0, %s53
      %s57 = sphi 0, %s56
      %s73 = sphi 0, %s57
      %s79 = sphi 0, %s81
      %s82 = sphi 0, %s79
      %s83 = sphi 0, %s82
      %s99 = sphi 0, %s83
      %s105 = sphi 0, %s107
      %s108 = sphi 0, %s105
      %s109 = sphi 0, %s108
      %s125 = sphi 0, %s109
      %s129 = sphi 0, %s129
      %s131 = sphi 0, %s129
      %s132 = sphi 0, %s131
      %s146 = sphi 0, %s132
      %s150 = sphi 0, %s150
      %s152 = sphi 0, %s150
      %s153 = sphi 0, %s152
      %s167 = sphi 0, %s153
      %s171 = sphi 0, %s171
      %s173 = sphi 0, %s171
      %s174 = sphi 0, %s173
      %s188 = sphi 0, %s174
      %s192 = sphi 0, %s192
      %s194 = sphi 0, %s192
      %s195 = sphi 0, %s194
      %s209 = sphi 0, %s195
      %s213 = sphi 0, %s213
      %s215 = sphi 0, %s213
      %s216 = sphi 0, %s215
      %s230 = sphi 0, %s216
      %s234 = sphi 0, %s234
      %s236 = sphi 0, %s234
      %s237 = sphi 0, %s236
      %s251 = sphi 0, %s237
      %s255 = sphi 0, %s255
      %s257 = sphi 0, %s255
      %s258 = sphi 0, %s257
      %s272 = sphi 0, %s258
      %s276 = sphi 0, %s276
      %s278 = sphi 0, %s276
      %s279 = sphi 0, %s278
      %s293 = sphi 0, %s279
      %s297 = sphi 0, %s297
      %s299 = sphi 0, %s297
      %s300 = sphi 0, %s299
      %s314 = sphi 0, %s300
      %s318 = sphi 0, %s318
      %s320 = sphi 0, %s318
      %s321 = sphi 0, %s320
      %s335 = sphi 0, %s321
      %s339 = sphi 0, %s339
      %s341 = sphi 0, %s339
      %s342 = sphi 0, %s341
      %s356 = sphi 0, %s342
      %s360 = sphi 0, %s360
      %s362 = sphi 0, %s360
      %s363 = sphi 0, %s362
      %s377 = sphi 0, %s363
      %s383 = sphi 0, %s385
      %s386 = sphi 0, %s383
      %s387 = sphi 0, %s386
      %s403 = sphi 0, %s387
      %s409 = sphi 0, %s411
      %s412 = sphi 0, %s409
      %s413 = sphi 0, %s412
      %s429 = sphi 0, %s413
      %s435 = sphi 0, %s437
      %s438 = sphi 0, %s435
      %s439 = sphi 0, %s438
      %s455 = sphi 0, %s439
      %s461 = sphi 0, %s463
      %s464 = sphi 0, %s461
      %s465 = sphi 0, %s464
      %s481 = sphi 0, %s465
    $region4: #{tpu_custom_call.1} parent=1 // loop_header_branch
      %46 = sbr.rel (%p44) target = $region8
    $region5: #{tpu_custom_call.1} parent=1 // loop_body
      %s48 = ssub.s32 %s43, 1
      %s49 = ssub.s32 %s43, 2
      %s50 = sadd.s32 %s43, 1
      %s51 = ssub.s32 %s43, %s50
      %p52 = scmp.eq.s32.totalorder %s51, 0
      %s54 = sadd.s32 %s53, 1
      %s55 = scalar_select %p52, %s53, %s54
      %p58 = pneg %p52
      %p59 = scmp.eq.s32.totalorder %s43, 1
      %p60 = por %p58, %p59
      %p61 = scmp.ne.s32.totalorder %s53, %s56
      %p62 = scmp.eq.s32.totalorder %s43, 0
      %p63 = por %p61, %p62
      %p64 = scmp.ne.s32.totalorder %s53, %s56
      %p65 = scmp.eq.s32.totalorder %s48, 1
      %p66 = por %p64, %p65
      %p67 = scmp.ne.s32.totalorder %s56, %s57
      %p68 = scmp.eq.s32.totalorder %s48, 0
      %p69 = por %p67, %p68
      %p70 = scmp.ne.s32.totalorder %s56, %s57
      %p71 = scmp.eq.s32.totalorder %s49, 1
      %p72 = por %p70, %p71
      %p74 = scmp.ne.s32.totalorder %s57, %s73
      %p75 = scmp.eq.s32.totalorder %s49, 0
      %p76 = por %p74, %p75
      %s77 = ssub.s32 %s43, %s50
      %p78 = scmp.eq.s32.totalorder %s77, 0
      %s80 = sadd.s32 %s79, 1
      %s81 = scalar_select %p78, %s79, %s80
      %p84 = pneg %p78
      %p85 = scmp.eq.s32.totalorder %s43, 1
      %p86 = por %p84, %p85
      %p87 = scmp.ne.s32.totalorder %s79, %s82
      %p88 = scmp.eq.s32.totalorder %s43, 0
      %p89 = por %p87, %p88
      %p90 = scmp.ne.s32.totalorder %s79, %s82
      %p91 = scmp.eq.s32.totalorder %s48, 1
      %p92 = por %p90, %p91
      %p93 = scmp.ne.s32.totalorder %s82, %s83
      %p94 = scmp.eq.s32.totalorder %s48, 0
      %p95 = por %p93, %p94
      %p96 = scmp.ne.s32.totalorder %s82, %s83
      %p97 = scmp.eq.s32.totalorder %s49, 1
      %p98 = por %p96, %p97
      %p100 = scmp.ne.s32.totalorder %s83, %s99
      %p101 = scmp.eq.s32.totalorder %s49, 0
      %p102 = por %p100, %p101
      %s103 = ssub.s32 %s43, %s50
      %p104 = scmp.eq.s32.totalorder %s103, 0
      %s106 = sadd.s32 %s105, 1
      %s107 = scalar_select %p104, %s105, %s106
      %p110 = pneg %p104
      %p111 = scmp.eq.s32.totalorder %s43, 1
      %p112 = por %p110, %p111
      %p113 = scmp.ne.s32.totalorder %s105, %s108
      %p114 = scmp.eq.s32.totalorder %s43, 0
      %p115 = por %p113, %p114
      %p116 = scmp.ne.s32.totalorder %s105, %s108
      %p117 = scmp.eq.s32.totalorder %s48, 1
      %p118 = por %p116, %p117
      %p119 = scmp.ne.s32.totalorder %s108, %s109
      %p120 = scmp.eq.s32.totalorder %s48, 0
      %p121 = por %p119, %p120
      %p122 = scmp.ne.s32.totalorder %s108, %s109
      %p123 = scmp.eq.s32.totalorder %s49, 1
      %p124 = por %p122, %p123
      %p126 = scmp.ne.s32.totalorder %s109, %s125
      %p127 = scmp.eq.s32.totalorder %s49, 0
      %p128 = por %p126, %p127
      %s130 = sadd.s32 %s129, 1
      %p133 = scmp.eq.s32.totalorder %s43, 1
      %p134 = scmp.ne.s32.totalorder %s129, %s131
      %p135 = scmp.eq.s32.totalorder %s43, 0
      %p136 = por %p134, %p135
      %p137 = scmp.ne.s32.totalorder %s129, %s131
      %p138 = scmp.eq.s32.totalorder %s48, 1
      %p139 = por %p137, %p138
      %p140 = scmp.ne.s32.totalorder %s131, %s132
      %p141 = scmp.eq.s32.totalorder %s48, 0
      %p142 = por %p140, %p141
      %p143 = scmp.ne.s32.totalorder %s131, %s132
      %p144 = scmp.eq.s32.totalorder %s49, 1
      %p145 = por %p143, %p144
      %p147 = scmp.ne.s32.totalorder %s132, %s146
      %p148 = scmp.eq.s32.totalorder %s49, 0
      %p149 = por %p147, %p148
      %s151 = sadd.s32 %s150, 1
      %p154 = scmp.eq.s32.totalorder %s43, 1
      %p155 = scmp.ne.s32.totalorder %s150, %s152
      %p156 = scmp.eq.s32.totalorder %s43, 0
      %p157 = por %p155, %p156
      %p158 = scmp.ne.s32.totalorder %s150, %s152
      %p159 = scmp.eq.s32.totalorder %s48, 1
      %p160 = por %p158, %p159
      %p161 = scmp.ne.s32.totalorder %s152, %s153
      %p162 = scmp.eq.s32.totalorder %s48, 0
      %p163 = por %p161, %p162
      %p164 = scmp.ne.s32.totalorder %s152, %s153
      %p165 = scmp.eq.s32.totalorder %s49, 1
      %p166 = por %p164, %p165
      %p168 = scmp.ne.s32.totalorder %s153, %s167
      %p169 = scmp.eq.s32.totalorder %s49, 0
      %p170 = por %p168, %p169
      %s172 = sadd.s32 %s171, 1
      %p175 = scmp.eq.s32.totalorder %s43, 1
      %p176 = scmp.ne.s32.totalorder %s171, %s173
      %p177 = scmp.eq.s32.totalorder %s43, 0
      %p178 = por %p176, %p177
      %p179 = scmp.ne.s32.totalorder %s171, %s173
      %p180 = scmp.eq.s32.totalorder %s48, 1
      %p181 = por %p179, %p180
      %p182 = scmp.ne.s32.totalorder %s173, %s174
      %p183 = scmp.eq.s32.totalorder %s48, 0
      %p184 = por %p182, %p183
      %p185 = scmp.ne.s32.totalorder %s173, %s174
      %p186 = scmp.eq.s32.totalorder %s49, 1
      %p187 = por %p185, %p186
      %p189 = scmp.ne.s32.totalorder %s174, %s188
      %p190 = scmp.eq.s32.totalorder %s49, 0
      %p191 = por %p189, %p190
      %s193 = sadd.s32 %s192, 1
      %p196 = scmp.eq.s32.totalorder %s43, 1
      %p197 = scmp.ne.s32.totalorder %s192, %s194
      %p198 = scmp.eq.s32.totalorder %s43, 0
      %p199 = por %p197, %p198
      %p200 = scmp.ne.s32.totalorder %s192, %s194
      %p201 = scmp.eq.s32.totalorder %s48, 1
      %p202 = por %p200, %p201
      %p203 = scmp.ne.s32.totalorder %s194, %s195
      %p204 = scmp.eq.s32.totalorder %s48, 0
      %p205 = por %p203, %p204
      %p206 = scmp.ne.s32.totalorder %s194, %s195
      %p207 = scmp.eq.s32.totalorder %s49, 1
      %p208 = por %p206, %p207
      %p210 = scmp.ne.s32.totalorder %s195, %s209
      %p211 = scmp.eq.s32.totalorder %s49, 0
      %p212 = por %p210, %p211
      %s214 = sadd.s32 %s213, 1
      %p217 = scmp.eq.s32.totalorder %s43, 1
      %p218 = scmp.ne.s32.totalorder %s213, %s215
      %p219 = scmp.eq.s32.totalorder %s43, 0
      %p220 = por %p218, %p219
      %p221 = scmp.ne.s32.totalorder %s213, %s215
      %p222 = scmp.eq.s32.totalorder %s48, 1
      %p223 = por %p221, %p222
      %p224 = scmp.ne.s32.totalorder %s215, %s216
      %p225 = scmp.eq.s32.totalorder %s48, 0
      %p226 = por %p224, %p225
      %p227 = scmp.ne.s32.totalorder %s215, %s216
      %p228 = scmp.eq.s32.totalorder %s49, 1
      %p229 = por %p227, %p228
      %p231 = scmp.ne.s32.totalorder %s216, %s230
      %p232 = scmp.eq.s32.totalorder %s49, 0
      %p233 = por %p231, %p232
      %s235 = sadd.s32 %s234, 1
      %p238 = scmp.eq.s32.totalorder %s43, 1
      %p239 = scmp.ne.s32.totalorder %s234, %s236
      %p240 = scmp.eq.s32.totalorder %s43, 0
      %p241 = por %p239, %p240
      %p242 = scmp.ne.s32.totalorder %s234, %s236
      %p243 = scmp.eq.s32.totalorder %s48, 1
      %p244 = por %p242, %p243
      %p245 = scmp.ne.s32.totalorder %s236, %s237
      %p246 = scmp.eq.s32.totalorder %s48, 0
      %p247 = por %p245, %p246
      %p248 = scmp.ne.s32.totalorder %s236, %s237
      %p249 = scmp.eq.s32.totalorder %s49, 1
      %p250 = por %p248, %p249
      %p252 = scmp.ne.s32.totalorder %s237, %s251
      %p253 = scmp.eq.s32.totalorder %s49, 0
      %p254 = por %p252, %p253
      %s256 = sadd.s32 %s255, 1
      %p259 = scmp.eq.s32.totalorder %s43, 1
      %p260 = scmp.ne.s32.totalorder %s255, %s257
      %p261 = scmp.eq.s32.totalorder %s43, 0
      %p262 = por %p260, %p261
      %p263 = scmp.ne.s32.totalorder %s255, %s257
      %p264 = scmp.eq.s32.totalorder %s48, 1
      %p265 = por %p263, %p264
      %p266 = scmp.ne.s32.totalorder %s257, %s258
      %p267 = scmp.eq.s32.totalorder %s48, 0
      %p268 = por %p266, %p267
      %p269 = scmp.ne.s32.totalorder %s257, %s258
      %p270 = scmp.eq.s32.totalorder %s49, 1
      %p271 = por %p269, %p270
      %p273 = scmp.ne.s32.totalorder %s258, %s272
      %p274 = scmp.eq.s32.totalorder %s49, 0
      %p275 = por %p273, %p274
      %s277 = sadd.s32 %s276, 1
      %p280 = scmp.eq.s32.totalorder %s43, 1
      %p281 = scmp.ne.s32.totalorder %s276, %s278
      %p282 = scmp.eq.s32.totalorder %s43, 0
      %p283 = por %p281, %p282
      %p284 = scmp.ne.s32.totalorder %s276, %s278
      %p285 = scmp.eq.s32.totalorder %s48, 1
      %p286 = por %p284, %p285
      %p287 = scmp.ne.s32.totalorder %s278, %s279
      %p288 = scmp.eq.s32.totalorder %s48, 0
      %p289 = por %p287, %p288
      %p290 = scmp.ne.s32.totalorder %s278, %s279
      %p291 = scmp.eq.s32.totalorder %s49, 1
      %p292 = por %p290, %p291
      %p294 = scmp.ne.s32.totalorder %s279, %s293
      %p295 = scmp.eq.s32.totalorder %s49, 0
      %p296 = por %p294, %p295
      %s298 = sadd.s32 %s297, 1
      %p301 = scmp.eq.s32.totalorder %s43, 1
      %p302 = scmp.ne.s32.totalorder %s297, %s299
      %p303 = scmp.eq.s32.totalorder %s43, 0
      %p304 = por %p302, %p303
      %p305 = scmp.ne.s32.totalorder %s297, %s299
      %p306 = scmp.eq.s32.totalorder %s48, 1
      %p307 = por %p305, %p306
      %p308 = scmp.ne.s32.totalorder %s299, %s300
      %p309 = scmp.eq.s32.totalorder %s48, 0
      %p310 = por %p308, %p309
      %p311 = scmp.ne.s32.totalorder %s299, %s300
      %p312 = scmp.eq.s32.totalorder %s49, 1
      %p313 = por %p311, %p312
      %p315 = scmp.ne.s32.totalorder %s300, %s314
      %p316 = scmp.eq.s32.totalorder %s49, 0
      %p317 = por %p315, %p316
      %s319 = sadd.s32 %s318, 1
      %p322 = scmp.eq.s32.totalorder %s43, 1
      %p323 = scmp.ne.s32.totalorder %s318, %s320
      %p324 = scmp.eq.s32.totalorder %s43, 0
      %p325 = por %p323, %p324
      %p326 = scmp.ne.s32.totalorder %s318, %s320
      %p327 = scmp.eq.s32.totalorder %s48, 1
      %p328 = por %p326, %p327
      %p329 = scmp.ne.s32.totalorder %s320, %s321
      %p330 = scmp.eq.s32.totalorder %s48, 0
      %p331 = por %p329, %p330
      %p332 = scmp.ne.s32.totalorder %s320, %s321
      %p333 = scmp.eq.s32.totalorder %s49, 1
      %p334 = por %p332, %p333
      %p336 = scmp.ne.s32.totalorder %s321, %s335
      %p337 = scmp.eq.s32.totalorder %s49, 0
      %p338 = por %p336, %p337
      %s340 = sadd.s32 %s339, 1
      %p343 = scmp.eq.s32.totalorder %s43, 1
      %p344 = scmp.ne.s32.totalorder %s339, %s341
      %p345 = scmp.eq.s32.totalorder %s43, 0
      %p346 = por %p344, %p345
      %p347 = scmp.ne.s32.totalorder %s339, %s341
      %p348 = scmp.eq.s32.totalorder %s48, 1
      %p349 = por %p347, %p348
      %p350 = scmp.ne.s32.totalorder %s341, %s342
      %p351 = scmp.eq.s32.totalorder %s48, 0
      %p352 = por %p350, %p351
      %p353 = scmp.ne.s32.totalorder %s341, %s342
      %p354 = scmp.eq.s32.totalorder %s49, 1
      %p355 = por %p353, %p354
      %p357 = scmp.ne.s32.totalorder %s342, %s356
      %p358 = scmp.eq.s32.totalorder %s49, 0
      %p359 = por %p357, %p358
      %s361 = sadd.s32 %s360, 1
      %p364 = scmp.eq.s32.totalorder %s43, 1
      %p365 = scmp.ne.s32.totalorder %s360, %s362
      %p366 = scmp.eq.s32.totalorder %s43, 0
      %p367 = por %p365, %p366
      %p368 = scmp.ne.s32.totalorder %s360, %s362
      %p369 = scmp.eq.s32.totalorder %s48, 1
      %p370 = por %p368, %p369
      %p371 = scmp.ne.s32.totalorder %s362, %s363
      %p372 = scmp.eq.s32.totalorder %s48, 0
      %p373 = por %p371, %p372
      %p374 = scmp.ne.s32.totalorder %s362, %s363
      %p375 = scmp.eq.s32.totalorder %s49, 1
      %p376 = por %p374, %p375
      %p378 = scmp.ne.s32.totalorder %s363, %s377
      %p379 = scmp.eq.s32.totalorder %s49, 0
      %p380 = por %p378, %p379
      %s381 = ssub.s32 %s43, %s50
      %p382 = scmp.eq.s32.totalorder %s381, 0
      %s384 = sadd.s32 %s383, 1
      %s385 = scalar_select %p382, %s383, %s384
      %p388 = pneg %p382
      %p389 = scmp.eq.s32.totalorder %s43, 1
      %p390 = por %p388, %p389
      %p391 = scmp.ne.s32.totalorder %s383, %s386
      %p392 = scmp.eq.s32.totalorder %s43, 0
      %p393 = por %p391, %p392
      %p394 = scmp.ne.s32.totalorder %s383, %s386
      %p395 = scmp.eq.s32.totalorder %s48, 1
      %p396 = por %p394, %p395
      %p397 = scmp.ne.s32.totalorder %s386, %s387
      %p398 = scmp.eq.s32.totalorder %s48, 0
      %p399 = por %p397, %p398
      %p400 = scmp.ne.s32.totalorder %s386, %s387
      %p401 = scmp.eq.s32.totalorder %s49, 1
      %p402 = por %p400, %p401
      %p404 = scmp.ne.s32.totalorder %s387, %s403
      %p405 = scmp.eq.s32.totalorder %s49, 0
      %p406 = por %p404, %p405
      %s407 = ssub.s32 %s43, %s50
      %p408 = scmp.eq.s32.totalorder %s407, 0
      %s410 = sadd.s32 %s409, 1
      %s411 = scalar_select %p408, %s409, %s410
      %p414 = pneg %p408
      %p415 = scmp.eq.s32.totalorder %s43, 1
      %p416 = por %p414, %p415
      %p417 = scmp.ne.s32.totalorder %s409, %s412
      %p418 = scmp.eq.s32.totalorder %s43, 0
      %p419 = por %p417, %p418
      %p420 = scmp.ne.s32.totalorder %s409, %s412
      %p421 = scmp.eq.s32.totalorder %s48, 1
      %p422 = por %p420, %p421
      %p423 = scmp.ne.s32.totalorder %s412, %s413
      %p424 = scmp.eq.s32.totalorder %s48, 0
      %p425 = por %p423, %p424
      %p426 = scmp.ne.s32.totalorder %s412, %s413
      %p427 = scmp.eq.s32.totalorder %s49, 1
      %p428 = por %p426, %p427
      %p430 = scmp.ne.s32.totalorder %s413, %s429
      %p431 = scmp.eq.s32.totalorder %s49, 0
      %p432 = por %p430, %p431
      %s433 = ssub.s32 %s43, %s50
      %p434 = scmp.eq.s32.totalorder %s433, 0
      %s436 = sadd.s32 %s435, 1
      %s437 = scalar_select %p434, %s435, %s436
      %p440 = pneg %p434
      %p441 = scmp.eq.s32.totalorder %s43, 1
      %p442 = por %p440, %p441
      %p443 = scmp.ne.s32.totalorder %s435, %s438
      %p444 = scmp.eq.s32.totalorder %s43, 0
      %p445 = por %p443, %p444
      %p446 = scmp.ne.s32.totalorder %s435, %s438
      %p447 = scmp.eq.s32.totalorder %s48, 1
      %p448 = por %p446, %p447
      %p449 = scmp.ne.s32.totalorder %s438, %s439
      %p450 = scmp.eq.s32.totalorder %s48, 0
      %p451 = por %p449, %p450
      %p452 = scmp.ne.s32.totalorder %s438, %s439
      %p453 = scmp.eq.s32.totalorder %s49, 1
      %p454 = por %p452, %p453
      %p456 = scmp.ne.s32.totalorder %s439, %s455
      %p457 = scmp.eq.s32.totalorder %s49, 0
      %p458 = por %p456, %p457
      %s459 = ssub.s32 %s43, %s50
      %p460 = scmp.eq.s32.totalorder %s459, 0
      %s462 = sadd.s32 %s461, 1
      %s463 = scalar_select %p460, %s461, %s462
      %p466 = pneg %p460
      %p467 = scmp.eq.s32.totalorder %s43, 1
      %p468 = por %p466, %p467
      %p469 = scmp.ne.s32.totalorder %s461, %s464
      %p470 = scmp.eq.s32.totalorder %s43, 0
      %p471 = por %p469, %p470
      %p472 = scmp.ne.s32.totalorder %s461, %s464
      %p473 = scmp.eq.s32.totalorder %s48, 1
      %p474 = por %p472, %p473
      %p475 = scmp.ne.s32.totalorder %s464, %s465
      %p476 = scmp.eq.s32.totalorder %s48, 0
      %p477 = por %p475, %p476
      %p478 = scmp.ne.s32.totalorder %s464, %s465
      %p479 = scmp.eq.s32.totalorder %s49, 1
      %p480 = por %p478, %p479
      %p482 = scmp.ne.s32.totalorder %s465, %s481
      %p483 = scmp.eq.s32.totalorder %s49, 0
      %p484 = por %p482, %p483
      %p485 = scmp.le.s32.totalorder 1, %s43
      %p486 = scmp.lt.s32.totalorder %s43, 3
      %p487 = pnand %p485, %p486
      %p488 = pneg %p487
      // Predicated region
      $region9: #{tpu_custom_call.1} parent=5 // pred_check
        _
      $region10: #{tpu_custom_call.1} parent=5 // pred_check_branch
        %490 = sbr.rel (%p487) target = $region12
      $region11: #{tpu_custom_call.1} parent=5 // pred_region
        %s491 = ssub.s32 %s43, 1
        // Predicated region
        $region13: #{tpu_custom_call.1} parent=11 // pred_check
          %p492 = pneg %p142
        $region14: #{tpu_custom_call.1} parent=11 // pred_check_branch
          %494 = sbr.rel (%p492) target = $region16
        $region15: #{tpu_custom_call.1} parent=11 // pred_region
          %496 = vsyncadd [#allocation9], 0
          %s497 = sshll.u32 %s3, 4
          %s498 = int_to_ptr.hbm [resolvable:$true] %s497
          %s499 = sshll.u32 [#allocation8], 4
          %s500 = int_to_ptr.vmem [resolvable:$true] %s499
          %505 = dma.hbm_to_vmem [thread:$0]  %s498, 512, %s500, [#allocation9], 128, 128, 8
        $region16: #{tpu_custom_call.1} parent=11 // pred_fallthru
          _
        // Predicated region
        $region17: #{tpu_custom_call.1} parent=11 // pred_check
          %p506 = pneg %p163
        $region18: #{tpu_custom_call.1} parent=11 // pred_check_branch
          %508 = sbr.rel (%p506) target = $region20
        $region19: #{tpu_custom_call.1} parent=11 // pred_region
          %510 = vsyncadd [#allocation9], 0
          %s511 = sshll.u32 %s4, 4
          %s512 = int_to_ptr.hbm [resolvable:$true] %s511
          %s513 = sshll.u32 [#allocation10], 4
          %s514 = int_to_ptr.vmem [resolvable:$true] %s513
          %519 = dma.hbm_to_vmem [thread:$0]  %s512, 512, %s514, [#allocation9], 128, 128, 8
        $region20: #{tpu_custom_call.1} parent=11 // pred_fallthru
          _
        // Predicated region
        $region21: #{tpu_custom_call.1} parent=11 // pred_check
          %p520 = pneg %p184
        $region22: #{tpu_custom_call.1} parent=11 // pred_check_branch
          %522 = sbr.rel (%p520) target = $region24
        $region23: #{tpu_custom_call.1} parent=11 // pred_region
          _
        $region24: #{tpu_custom_call.1} parent=11 // pred_fallthru
          _
        // Predicated region
        $region25: #{tpu_custom_call.1} parent=11 // pred_check
          %p523 = pneg %p205
        $region26: #{tpu_custom_call.1} parent=11 // pred_check_branch
          %525 = sbr.rel (%p523) target = $region28
        $region27: #{tpu_custom_call.1} parent=11 // pred_region
          _
        $region28: #{tpu_custom_call.1} parent=11 // pred_fallthru
          _
        // Predicated region
        $region29: #{tpu_custom_call.1} parent=11 // pred_check
          %p526 = pneg %p226
        $region30: #{tpu_custom_call.1} parent=11 // pred_check_branch
          %528 = sbr.rel (%p526) target = $region32
        $region31: #{tpu_custom_call.1} parent=11 // pred_region
          %530 = vsyncadd [#allocation12], 0
          %s531 = sshll.u32 %s7, 4
          %s532 = int_to_ptr.hbm [resolvable:$true] %s531
          %s533 = sshll.u32 [#allocation11], 4
          %s534 = int_to_ptr.vmem [resolvable:$true] %s533
          %539 = dma.hbm_to_vmem [thread:$0]  %s532, 512, %s534, [#allocation12], 128, 128, 8
        $region32: #{tpu_custom_call.1} parent=11 // pred_fallthru
          _
        // Predicated region
        $region33: #{tpu_custom_call.1} parent=11 // pred_check
          %p540 = pneg %p247
        $region34: #{tpu_custom_call.1} parent=11 // pred_check_branch
          %542 = sbr.rel (%p540) target = $region36
        $region35: #{tpu_custom_call.1} parent=11 // pred_region
          _
        $region36: #{tpu_custom_call.1} parent=11 // pred_fallthru
          _
        // Predicated region
        $region37: #{tpu_custom_call.1} parent=11 // pred_check
          %p543 = pneg %p268
        $region38: #{tpu_custom_call.1} parent=11 // pred_check_branch
          %545 = sbr.rel (%p543) target = $region40
        $region39: #{tpu_custom_call.1} parent=11 // pred_region
          %547 = vsyncadd [#allocation12], 0
          %s548 = sshll.u32 %s9, 4
          %s549 = int_to_ptr.hbm [resolvable:$true] %s548
          %s550 = sshll.u32 [#allocation13], 4
          %s551 = int_to_ptr.vmem [resolvable:$true] %s550
          %556 = dma.hbm_to_vmem [thread:$0]  %s549, 512, %s551, [#allocation12], 128, 128, 8
        $region40: #{tpu_custom_call.1} parent=11 // pred_fallthru
          _
        // Predicated region
        $region41: #{tpu_custom_call.1} parent=11 // pred_check
          %p557 = pneg %p289
        $region42: #{tpu_custom_call.1} parent=11 // pred_check_branch
          %559 = sbr.rel (%p557) target = $region44
        $region43: #{tpu_custom_call.1} parent=11 // pred_region
          %561 = vsyncadd [#allocation15], 0
          %s562 = sshll.u32 %s10, 4
          %s563 = int_to_ptr.hbm [resolvable:$true] %s562
          %s564 = sshll.u32 [#allocation14], 4
          %s565 = int_to_ptr.vmem [resolvable:$true] %s564
          %570 = dma.hbm_to_vmem [thread:$0]  %s563, 512, %s565, [#allocation15], 128, 128, 8
        $region44: #{tpu_custom_call.1} parent=11 // pred_fallthru
          _
        // Predicated region
        $region45: #{tpu_custom_call.1} parent=11 // pred_check
          %p571 = pneg %p310
        $region46: #{tpu_custom_call.1} parent=11 // pred_check_branch
          %573 = sbr.rel (%p571) target = $region48
        $region47: #{tpu_custom_call.1} parent=11 // pred_region
          _
        $region48: #{tpu_custom_call.1} parent=11 // pred_fallthru
          _
        // Predicated region
        $region49: #{tpu_custom_call.1} parent=11 // pred_check
          %p574 = pneg %p331
        $region50: #{tpu_custom_call.1} parent=11 // pred_check_branch
          %576 = sbr.rel (%p574) target = $region52
        $region51: #{tpu_custom_call.1} parent=11 // pred_region
          _
        $region52: #{tpu_custom_call.1} parent=11 // pred_fallthru
          _
        // Predicated region
        $region53: #{tpu_custom_call.1} parent=11 // pred_check
          %p577 = pneg %p352
        $region54: #{tpu_custom_call.1} parent=11 // pred_check_branch
          %579 = sbr.rel (%p577) target = $region56
        $region55: #{tpu_custom_call.1} parent=11 // pred_region
          %581 = vsyncadd [#allocation15], 0
          %s582 = sshll.u32 %s13, 4
          %s583 = int_to_ptr.hbm [resolvable:$true] %s582
          %s584 = sshll.u32 [#allocation16], 4
          %s585 = int_to_ptr.vmem [resolvable:$true] %s584
          %590 = dma.hbm_to_vmem [thread:$0]  %s583, 512, %s585, [#allocation15], 128, 128, 8
        $region56: #{tpu_custom_call.1} parent=11 // pred_fallthru
          _
        // Predicated region
        $region57: #{tpu_custom_call.1} parent=11 // pred_check
          %p591 = pneg %p373
        $region58: #{tpu_custom_call.1} parent=11 // pred_check_branch
          %593 = sbr.rel (%p591) target = $region60
        $region59: #{tpu_custom_call.1} parent=11 // pred_region
          _
        $region60: #{tpu_custom_call.1} parent=11 // pred_fallthru
          _
      $region12: #{tpu_custom_call.1} parent=5 // pred_fallthru
        _
      %p594 = scmp.lt.s32.totalorder %s43, 2
      // Predicated region
      $region61: #{tpu_custom_call.1} parent=5 // pred_check
        %p595 = pneg %p594
      $region62: #{tpu_custom_call.1} parent=5 // pred_check_branch
        %597 = sbr.rel (%p595) target = $region64
      $region63: #{tpu_custom_call.1} parent=5 // pred_region
        // Predicated region
        $region65: #{tpu_custom_call.1} parent=63 // pred_check
          %p598 = pneg %p63
        $region66: #{tpu_custom_call.1} parent=63 // pred_check_branch
          %600 = sbr.rel (%p598) target = $region68
        $region67: #{tpu_custom_call.1} parent=63 // pred_region
          %s601 = sand.u32 %s53, 1
          %s602 = scalar_lea.sflag [#allocation3], %s601
          %s603 = sand.u32 %s53, 1
          %s604 = smul.addr %s603, 8
          %s605 = scalar_lea.vmem [#allocation2], %s604
          %607 = vsyncadd %s602, 0
          %s608 = smul.addr %s43, 8
          %s609 = scalar_lea.hbm %s0, %s608
          %s611 = sshll.u32 %s609, 4
          %s612 = int_to_ptr.hbm [resolvable:$true] %s611
          %s613 = sshll.u32 %s605, 4
          %s614 = int_to_ptr.vmem [resolvable:$true] %s613
          %616 = dma.hbm_to_vmem [thread:$0]  %s612, 128, %s614, %s602
        $region68: #{tpu_custom_call.1} parent=63 // pred_fallthru
          _
        // Predicated region
        $region69: #{tpu_custom_call.1} parent=63 // pred_check
          %p617 = pneg %p89
        $region70: #{tpu_custom_call.1} parent=63 // pred_check_branch
          %619 = sbr.rel (%p617) target = $region72
        $region71: #{tpu_custom_call.1} parent=63 // pred_region
          %s620 = sand.u32 %s43, 1
          %s621 = scalar_lea.sflag [#allocation6], %s620
          %s622 = sand.u32 %s79, 1
          %s623 = smul.addr %s622, 8
          %s624 = scalar_lea.vmem [#allocation5], %s623
          %626 = vsyncadd %s621, 0
          %s627 = smul.addr %s43, 8
          %s628 = scalar_lea.hbm %s1, %s627
          %s630 = sshll.u32 %s628, 4
          %s631 = int_to_ptr.hbm [resolvable:$true] %s630
          %s632 = sshll.u32 %s624, 4
          %s633 = int_to_ptr.vmem [resolvable:$true] %s632
          %635 = dma.hbm_to_vmem [thread:$0]  %s631, 128, %s633, %s621
        $region72: #{tpu_custom_call.1} parent=63 // pred_fallthru
          _
        // Predicated region
        $region73: #{tpu_custom_call.1} parent=63 // pred_check
          %p636 = pneg %p115
        $region74: #{tpu_custom_call.1} parent=63 // pred_check_branch
          %638 = sbr.rel (%p636) target = $region76
        $region75: #{tpu_custom_call.1} parent=63 // pred_region
          %s639 = sand.u32 %s43, 1
          %s640 = scalar_lea.sflag [#allocation6], %s639
          %s641 = sand.u32 %s105, 1
          %s642 = smul.addr %s641, 8
          %s643 = scalar_lea.vmem [#allocation7], %s642
          %645 = vsyncadd %s640, 0
          %s646 = smul.addr %s43, 8
          %s647 = scalar_lea.hbm %s2, %s646
          %s649 = sshll.u32 %s647, 4
          %s650 = int_to_ptr.hbm [resolvable:$true] %s649
          %s651 = sshll.u32 %s643, 4
          %s652 = int_to_ptr.vmem [resolvable:$true] %s651
          %654 = dma.hbm_to_vmem [thread:$0]  %s650, 128, %s652, %s640
        $region76: #{tpu_custom_call.1} parent=63 // pred_fallthru
          _
      $region64: #{tpu_custom_call.1} parent=5 // pred_fallthru
        _
      %p655 = scmp.le.s32.totalorder 1, %s43
      %p656 = scmp.lt.s32.totalorder %s43, 3
      %p657 = pnand %p655, %p656
      %p658 = pneg %p657
      // Predicated region
      $region77: #{tpu_custom_call.1} parent=5 // pred_check
        _
      $region78: #{tpu_custom_call.1} parent=5 // pred_check_branch
        %660 = sbr.rel (%p657) target = $region80
      $region79: #{tpu_custom_call.1} parent=5 // pred_region
        %s661 = ssub.s32 %s43, 1
        %s662 = sand.u32 %s56, 1
        %s663 = scalar_lea.sflag [#allocation3], %s662
        %s664 = sand.u32 %s56, 1
        %s665 = smul.addr %s664, 8
        %s666 = scalar_lea.vmem [#allocation2], %s665
        // Predicated region
        $region81: #{tpu_custom_call.1} parent=79 // pred_check
          %p667 = pneg %p69
        $region82: #{tpu_custom_call.1} parent=79 // pred_check_branch
          %669 = sbr.rel (%p667) target = $region84
        $region83: #{tpu_custom_call.1} parent=79 // pred_region
          %671 = dma.done %s663, 128
        $region84: #{tpu_custom_call.1} parent=79 // pred_fallthru
          _
        %s672 = sand.u32 %s48, 1
        %s673 = scalar_lea.sflag [#allocation6], %s672
        %s674 = sand.u32 %s82, 1
        %s675 = smul.addr %s674, 8
        %s676 = scalar_lea.vmem [#allocation5], %s675
        // Predicated region
        $region85: #{tpu_custom_call.1} parent=79 // pred_check
          %p677 = pneg %p95
        $region86: #{tpu_custom_call.1} parent=79 // pred_check_branch
          %679 = sbr.rel (%p677) target = $region88
        $region87: #{tpu_custom_call.1} parent=79 // pred_region
          %681 = dma.done %s673, 128
        $region88: #{tpu_custom_call.1} parent=79 // pred_fallthru
          _
        %s682 = sand.u32 %s48, 1
        %s683 = scalar_lea.sflag [#allocation6], %s682
        %s684 = sand.u32 %s108, 1
        %s685 = smul.addr %s684, 8
        %s686 = scalar_lea.vmem [#allocation7], %s685
        // Predicated region
        $region89: #{tpu_custom_call.1} parent=79 // pred_check
          %p687 = pneg %p121
        $region90: #{tpu_custom_call.1} parent=79 // pred_check_branch
          %689 = sbr.rel (%p687) target = $region92
        $region91: #{tpu_custom_call.1} parent=79 // pred_region
          %691 = dma.done %s683, 128
        $region92: #{tpu_custom_call.1} parent=79 // pred_fallthru
          _
        // Predicated region
        $region93: #{tpu_custom_call.1} parent=79 // pred_check
          %p692 = pneg %p142
        $region94: #{tpu_custom_call.1} parent=79 // pred_check_branch
          %694 = sbr.rel (%p692) target = $region96
        $region95: #{tpu_custom_call.1} parent=79 // pred_region
          %696 = dma.done [#allocation9], 512
        $region96: #{tpu_custom_call.1} parent=79 // pred_fallthru
          _
        // Predicated region
        $region97: #{tpu_custom_call.1} parent=79 // pred_check
          %p697 = pneg %p163
        $region98: #{tpu_custom_call.1} parent=79 // pred_check_branch
          %699 = sbr.rel (%p697) target = $region100
        $region99: #{tpu_custom_call.1} parent=79 // pred_region
          %701 = dma.done [#allocation9], 512
        $region100: #{tpu_custom_call.1} parent=79 // pred_fallthru
          _
        // Predicated region
        $region101: #{tpu_custom_call.1} parent=79 // pred_check
          %p702 = pneg %p226
        $region102: #{tpu_custom_call.1} parent=79 // pred_check_branch
          %704 = sbr.rel (%p702) target = $region104
        $region103: #{tpu_custom_call.1} parent=79 // pred_region
          %706 = dma.done [#allocation12], 512
        $region104: #{tpu_custom_call.1} parent=79 // pred_fallthru
          _
        // Predicated region
        $region105: #{tpu_custom_call.1} parent=79 // pred_check
          %p707 = pneg %p268
        $region106: #{tpu_custom_call.1} parent=79 // pred_check_branch
          %709 = sbr.rel (%p707) target = $region108
        $region107: #{tpu_custom_call.1} parent=79 // pred_region
          %711 = dma.done [#allocation12], 512
        $region108: #{tpu_custom_call.1} parent=79 // pred_fallthru
          _
        // Predicated region
        $region109: #{tpu_custom_call.1} parent=79 // pred_check
          %p712 = pneg %p289
        $region110: #{tpu_custom_call.1} parent=79 // pred_check_branch
          %714 = sbr.rel (%p712) target = $region112
        $region111: #{tpu_custom_call.1} parent=79 // pred_region
          %716 = dma.done [#allocation15], 512
        $region112: #{tpu_custom_call.1} parent=79 // pred_fallthru
          _
        // Predicated region
        $region113: #{tpu_custom_call.1} parent=79 // pred_check
          %p717 = pneg %p352
        $region114: #{tpu_custom_call.1} parent=79 // pred_check_branch
          %719 = sbr.rel (%p717) target = $region116
        $region115: #{tpu_custom_call.1} parent=79 // pred_region
          %721 = dma.done [#allocation15], 512
        $region116: #{tpu_custom_call.1} parent=79 // pred_fallthru
          _
        %s722 = sand.u32 %s56, 1
        %s723 = scalar_lea.sflag [#allocation3], %s722
        %s724 = sand.u32 %s56, 1
        %s725 = smul.addr %s724, 8
        %s726 = scalar_lea.vmem [#allocation2], %s725
        %p727 = pneg %p69
        %p728 = pneg %p66
        %s729 = sand.u32 %s48, 1
        %s730 = scalar_lea.sflag [#allocation6], %s729
        %s731 = sand.u32 %s82, 1
        %s732 = smul.addr %s731, 8
        %s733 = scalar_lea.vmem [#allocation5], %s732
        %p734 = pneg %p95
        %p735 = pneg %p92
        %s736 = sand.u32 %s48, 1
        %s737 = scalar_lea.sflag [#allocation6], %s736
        %s738 = sand.u32 %s108, 1
        %s739 = smul.addr %s738, 8
        %s740 = scalar_lea.vmem [#allocation7], %s739
        %p741 = pneg %p121
        %p742 = pneg %p118
        %p743 = pneg %p142
        %p744 = pneg %p139
        %p745 = pneg %p163
        %p746 = pneg %p160
        %p747 = pneg %p184
        %p748 = pneg %p181
        %p749 = pneg %p205
        %p750 = pneg %p202
        %p751 = pneg %p226
        %p752 = pneg %p223
        %p753 = pneg %p247
        %p754 = pneg %p244
        %p755 = pneg %p268
        %p756 = pneg %p265
        %p757 = pneg %p289
        %p758 = pneg %p286
        %p759 = pneg %p310
        %p760 = pneg %p307
        %p761 = pneg %p331
        %p762 = pneg %p328
        %p763 = pneg %p352
        %p764 = pneg %p349
        %p765 = pneg %p373
        %p766 = pneg %p370
        %p767 = pneg %p399
        %p768 = pneg %p396
        %s769 = sand.u32 %s386, 1
        %s770 = scalar_lea.sflag [#allocation4], %s769
        %s771 = sand.u32 %s386, 1
        %s772 = smul.addr %s771, 8
        %s773 = scalar_lea.vmem [#allocation17], %s772
        %p774 = pneg %p425
        %p775 = pneg %p422
        %s776 = sand.u32 %s48, 1
        %s777 = scalar_lea.sflag [#allocation19], %s776
        %s778 = sand.u32 %s412, 1
        %s779 = smul.addr %s778, 8
        %s780 = scalar_lea.vmem [#allocation18], %s779
        %p781 = pneg %p451
        %p782 = pneg %p448
        %s783 = sand.u32 %s48, 1
        %s784 = scalar_lea.sflag [#allocation19], %s783
        %s785 = sand.u32 %s438, 1
        %s786 = smul.addr %s785, 8
        %s787 = scalar_lea.vmem [#allocation20], %s786
        %p788 = pneg %p477
        %p789 = pneg %p474
        %s790 = sand.u32 %s464, 1
        %s791 = scalar_lea.sflag [#allocation22], %s790
        %s792 = sand.u32 %s464, 1
        %s793 = smul.addr %s792, 8
        %s794 = scalar_lea.vmem [#allocation21], %s793
        %v795 = vld [vmem:[%s666] sm:$0xff]
        %v796 = vld [vmem:[%s676] sm:$0xff]
        %v797 = vadd.f32 %v795, %v796
        %v798 = vld [vmem:[%s686] sm:$0xff]
        %v799 = vld [vmem:[#allocation8] sm:$0xff]
        %v800 = vld [vmem:[#allocation8 + $0x8] sm:$0xff]
        %v801 = vld [vmem:[#allocation8 + $0x10] sm:$0xff]
        %v802 = vld [vmem:[#allocation8 + $0x18] sm:$0xff]
        %v803 = vld [vmem:[%s5] sm:$0x1]
        %v805 = vperm.slane %v803, 0
        %vm807 = vcmask 261120
        %v809 = vsel %vm807, %v797, 0
        %811 = vmatpush.msra.mxu0 0.0
        %812 = vmatpush.msra.mxu0 0.0
        %813 = vmatpush.msra.mxu0 0.0
        %814 = vmatpush.msra.mxu0 0.0
        %815 = vmatpush.msra.mxu0 0.0
        %816 = vmatpush.msra.mxu0 0.0
        %817 = vmatpush.msra.mxu0 0.0
        %818 = vmatpush.msra.mxu0 0.0
        %819 = vmatpush.msra.mxu0 0.0
        %820 = vmatpush.msra.mxu0 0.0
        %821 = vmatpush.msra.mxu0 0.0
        %822 = vmatpush.msra.mxu0 0.0
        %823 = vmatpush.msra.mxu0 %v802
        %824 = vmatpush.msra.mxu0 %v801
        %825 = vmatpush.msra.mxu0 %v800
        %826 = vmatpush.msra.mxu0 %v799
        %827 = vmatmul.f32.gmra.mxu0 %v809
        %v828 = vpop.f32.mrf.mxu0
        %v829 = vadd.f32 %v805, %v828
        %830 = vdwg.mxu0
        %v831 = vmul.f32 %v829, 0.35355338
        %v832 = vld [vmem:[#allocation10] sm:$0xff]
        %v833 = vld [vmem:[#allocation10 + $0x8] sm:$0xff]
        %v834 = vld [vmem:[#allocation10 + $0x10] sm:$0xff]
        %v835 = vld [vmem:[#allocation10 + $0x18] sm:$0xff]
        %v836 = vld [vmem:[%s6] sm:$0x1]
        %v838 = vperm.slane %v836, 0
        %v841 = vsel %vm807, %v798, 0
        %843 = vmatpush.msra.mxu0 0.0
        %844 = vmatpush.msra.mxu0 0.0
        %845 = vmatpush.msra.mxu0 0.0
        %846 = vmatpush.msra.mxu0 0.0
        %847 = vmatpush.msra.mxu0 0.0
        %848 = vmatpush.msra.mxu0 0.0
        %849 = vmatpush.msra.mxu0 0.0
        %850 = vmatpush.msra.mxu0 0.0
        %851 = vmatpush.msra.mxu0 0.0
        %852 = vmatpush.msra.mxu0 0.0
        %853 = vmatpush.msra.mxu0 0.0
        %854 = vmatpush.msra.mxu0 0.0
        %855 = vmatpush.msra.mxu0 %v835
        %856 = vmatpush.msra.mxu0 %v834
        %857 = vmatpush.msra.mxu0 %v833
        %858 = vmatpush.msra.mxu0 %v832
        %859 = vmatmul.f32.gmra.mxu0 %v841
        %v860 = vpop.f32.mrf.mxu0
        %v861 = vadd.f32 %v838, %v860
        %862 = vdwg.mxu0
        %864 = vrot.lane.b32.xlu0 %v831, 120
        %v865 = vpop.permute.xlu0 %864
        %867 = vrot.lane.b32.xlu0 %v831, 112
        %v868 = vpop.permute.xlu0 %867
        %870 = vrot.lane.b32.xlu0 %v831, 104
        %v871 = vpop.permute.xlu0 %870
        %v873 = vrot.slane %v868, 4
        %vm874 = vcmask 1047556
        %v875 = vsel %vm874, %v873, %v831
        %v876 = vrot.slane %v831, 4
        %v877 = vsel %vm874, %v868, %v876
        %v879 = vunpack.c.l.s4 1983009808
        %v880 = vunpack.c.0.s8 %v879
        %v881 = vperm.slane %v875, %v880
        %v883 = vunpack.c.l.s4 1983009808
        %v884 = vunpack.c.0.s8 %v883
        %v885 = vperm.slane %v877, %v884
        %v886 = vrot.slane %v871, 4
        %v887 = vsel %vm874, %v886, %v865
        %v888 = vrot.slane %v865, 4
        %v889 = vsel %vm874, %v871, %v888
        %v891 = vunpack.c.l.s4 1983009808
        %v892 = vunpack.c.0.s8 %v891
        %v893 = vperm.slane %v887, %v892
        %v895 = vunpack.c.l.s4 1983009808
        %v896 = vunpack.c.0.s8 %v895
        %v897 = vperm.slane %v889, %v896
        %v898 = vrot.slane %v893, 4
        %v899 = vsel %vm874, %v898, %v881
        %v900 = vrot.slane %v881, 4
        %v901 = vsel %vm874, %v893, %v900
        %v903 = vunpack.c.l.s4 1934713408
        %v904 = vunpack.c.0.s8 %v903
        %v905 = vperm.slane %v899, %v904
        %v907 = vunpack.c.l.s4 1934713408
        %v908 = vunpack.c.0.s8 %v907
        %v909 = vperm.slane %v901, %v908
        %v910 = vrot.slane %v897, 4
        %v911 = vsel %vm874, %v910, %v885
        %v912 = vrot.slane %v885, 4
        %v913 = vsel %vm874, %v897, %v912
        %v915 = vunpack.c.l.s4 1934713408
        %v916 = vunpack.c.0.s8 %v915
        %v917 = vperm.slane %v911, %v916
        %v919 = vunpack.c.l.s4 1934713408
        %v920 = vunpack.c.0.s8 %v919
        %v921 = vperm.slane %v913, %v920
        %v922 = vrot.slane %v905, 4
        %v923 = vsel %vm874, 0.0, %v922
        %v924 = vrot.slane %v909, 4
        %v925 = vsel %vm874, 0.0, %v924
        %v926 = vrot.slane %v917, 4
        %v927 = vsel %vm874, 0.0, %v926
        %v928 = vrot.slane %v921, 4
        %v929 = vsel %vm874, 0.0, %v928
        %v930 = vsel %vm874, %v924, %v905
        %v932 = vunpack.c.l.s4 1983009808
        %v933 = vunpack.c.0.s8 %v932
        %v934 = vperm.slane %v930, %v933
        %v935 = vrot.slane %v925, 4
        %v936 = vsel %vm874, %v935, %v923
        %v938 = vunpack.c.l.s4 1983009808
        %v939 = vunpack.c.0.s8 %v938
        %v940 = vperm.slane %v936, %v939
        %v941 = vsel %vm874, %v928, %v917
        %v943 = vunpack.c.l.s4 1983009808
        %v944 = vunpack.c.0.s8 %v943
        %v945 = vperm.slane %v941, %v944
        %v946 = vrot.slane %v929, 4
        %v947 = vsel %vm874, %v946, %v927
        %v949 = vunpack.c.l.s4 1983009808
        %v950 = vunpack.c.0.s8 %v949
        %v951 = vperm.slane %v947, %v950
        %v952 = vrot.slane %v940, 4
        %v953 = vsel %vm874, %v952, %v934
        %v954 = vrot.slane %v934, 4
        %v955 = vsel %vm874, %v940, %v954
        %v957 = vunpack.c.l.s4 1934713408
        %v958 = vunpack.c.0.s8 %v957
        %v959 = vperm.slane %v953, %v958
        %v961 = vunpack.c.l.s4 1934713408
        %v962 = vunpack.c.0.s8 %v961
        %v963 = vperm.slane %v955, %v962
        %v964 = vrot.slane %v951, 4
        %v965 = vsel %vm874, %v964, %v945
        %v966 = vrot.slane %v945, 4
        %v967 = vsel %vm874, %v951, %v966
        %v969 = vunpack.c.l.s4 1934713408
        %v970 = vunpack.c.0.s8 %v969
        %v971 = vperm.slane %v965, %v970
        %v973 = vunpack.c.l.s4 1934713408
        %v974 = vunpack.c.0.s8 %v973
        %v975 = vperm.slane %v967, %v974
        %v976 = vrot.slane %v971, 4
        %v977 = vsel %vm874, %v976, %v959
        %v978 = vrot.slane %v959, 4
        %v979 = vsel %vm874, %v971, %v978
        %v980 = vrot.slane %v975, 4
        %v981 = vsel %vm874, %v980, %v963
        %v982 = vrot.slane %v963, 4
        %v983 = vsel %vm874, %v975, %v982
        %985 = vrot.lane.b32.xlu0 %v861, 120
        %v986 = vpop.permute.xlu0 %985
        %988 = vrot.lane.b32.xlu0 %v861, 112
        %v989 = vpop.permute.xlu0 %988
        %991 = vrot.lane.b32.xlu0 %v861, 104
        %v992 = vpop.permute.xlu0 %991
        %v994 = vrot.slane %v989, 4
        %v995 = vsel %vm874, %v994, %v861
        %v996 = vrot.slane %v861, 4
        %v997 = vsel %vm874, %v989, %v996
        %v999 = vunpack.c.l.s4 1983009808
        %v1000 = vunpack.c.0.s8 %v999
        %v1001 = vperm.slane %v995, %v1000
        %v1003 = vunpack.c.l.s4 1983009808
        %v1004 = vunpack.c.0.s8 %v1003
        %v1005 = vperm.slane %v997, %v1004
        %v1006 = vrot.slane %v992, 4
        %v1007 = vsel %vm874, %v1006, %v986
        %v1008 = vrot.slane %v986, 4
        %v1009 = vsel %vm874, %v992, %v1008
        %v1011 = vunpack.c.l.s4 1983009808
        %v1012 = vunpack.c.0.s8 %v1011
        %v1013 = vperm.slane %v1007, %v1012
        %v1015 = vunpack.c.l.s4 1983009808
        %v1016 = vunpack.c.0.s8 %v1015
        %v1017 = vperm.slane %v1009, %v1016
        %v1018 = vrot.slane %v1013, 4
        %v1019 = vsel %vm874, %v1018, %v1001
        %v1020 = vrot.slane %v1001, 4
        %v1021 = vsel %vm874, %v1013, %v1020
        %v1023 = vunpack.c.l.s4 1934713408
        %v1024 = vunpack.c.0.s8 %v1023
        %v1025 = vperm.slane %v1019, %v1024
        %v1027 = vunpack.c.l.s4 1934713408
        %v1028 = vunpack.c.0.s8 %v1027
        %v1029 = vperm.slane %v1021, %v1028
        %v1030 = vrot.slane %v1017, 4
        %v1031 = vsel %vm874, %v1030, %v1005
        %v1032 = vrot.slane %v1005, 4
        %v1033 = vsel %vm874, %v1017, %v1032
        %v1035 = vunpack.c.l.s4 1934713408
        %v1036 = vunpack.c.0.s8 %v1035
        %v1037 = vperm.slane %v1031, %v1036
        %v1039 = vunpack.c.l.s4 1934713408
        %v1040 = vunpack.c.0.s8 %v1039
        %v1041 = vperm.slane %v1033, %v1040
        %v1042 = vrot.slane %v1025, 4
        %v1043 = vsel %vm874, 0.0, %v1042
        %v1044 = vrot.slane %v1029, 4
        %v1045 = vsel %vm874, 0.0, %v1044
        %v1046 = vrot.slane %v1037, 4
        %v1047 = vsel %vm874, 0.0, %v1046
        %v1048 = vrot.slane %v1041, 4
        %v1049 = vsel %vm874, 0.0, %v1048
        %v1050 = vsel %vm874, %v1044, %v1025
        %v1052 = vunpack.c.l.s4 1983009808
        %v1053 = vunpack.c.0.s8 %v1052
        %v1054 = vperm.slane %v1050, %v1053
        %v1055 = vrot.slane %v1045, 4
        %v1056 = vsel %vm874, %v1055, %v1043
        %v1058 = vunpack.c.l.s4 1983009808
        %v1059 = vunpack.c.0.s8 %v1058
        %v1060 = vperm.slane %v1056, %v1059
        %v1061 = vsel %vm874, %v1048, %v1037
        %v1063 = vunpack.c.l.s4 1983009808
        %v1064 = vunpack.c.0.s8 %v1063
        %v1065 = vperm.slane %v1061, %v1064
        %v1066 = vrot.slane %v1049, 4
        %v1067 = vsel %vm874, %v1066, %v1047
        %v1069 = vunpack.c.l.s4 1983009808
        %v1070 = vunpack.c.0.s8 %v1069
        %v1071 = vperm.slane %v1067, %v1070
        %v1072 = vrot.slane %v1060, 4
        %v1073 = vsel %vm874, %v1072, %v1054
        %v1074 = vrot.slane %v1054, 4
        %v1075 = vsel %vm874, %v1060, %v1074
        %v1077 = vunpack.c.l.s4 1934713408
        %v1078 = vunpack.c.0.s8 %v1077
        %v1079 = vperm.slane %v1073, %v1078
        %v1081 = vunpack.c.l.s4 1934713408
        %v1082 = vunpack.c.0.s8 %v1081
        %v1083 = vperm.slane %v1075, %v1082
        %v1084 = vrot.slane %v1071, 4
        %v1085 = vsel %vm874, %v1084, %v1065
        %v1086 = vrot.slane %v1065, 4
        %v1087 = vsel %vm874, %v1071, %v1086
        %v1089 = vunpack.c.l.s4 1934713408
        %v1090 = vunpack.c.0.s8 %v1089
        %v1091 = vperm.slane %v1085, %v1090
        %v1093 = vunpack.c.l.s4 1934713408
        %v1094 = vunpack.c.0.s8 %v1093
        %v1095 = vperm.slane %v1087, %v1094
        %v1096 = vrot.slane %v1091, 4
        %v1097 = vsel %vm874, %v1096, %v1079
        %v1098 = vrot.slane %v1079, 4
        %v1099 = vsel %vm874, %v1091, %v1098
        %v1100 = vrot.slane %v1095, 4
        %v1101 = vsel %vm874, %v1100, %v1083
        %v1102 = vrot.slane %v1083, 4
        %v1103 = vsel %vm874, %v1095, %v1102
        %1104 = vrot.lane.b32.xlu0 %v861, 96
        %v1105 = vpop.permute.xlu0 %1104
        %1106 = vrot.lane.b32.xlu0 %v986, 96
        %v1107 = vpop.permute.xlu0 %1106
        %1108 = vrot.lane.b32.xlu0 %v989, 96
        %v1109 = vpop.permute.xlu0 %1108
        %1110 = vrot.lane.b32.xlu0 %v992, 96
        %v1111 = vpop.permute.xlu0 %1110
        %v1116 = vrot.slane %v1109, 4
        %v1117 = vsel %vm874, %v1116, %v1105
        %v1118 = vrot.slane %v1105, 4
        %v1119 = vsel %vm874, %v1109, %v1118
        %v1121 = vunpack.c.l.s4 1983009808
        %v1122 = vunpack.c.0.s8 %v1121
        %v1123 = vperm.slane %v1117, %v1122
        %v1125 = vunpack.c.l.s4 1983009808
        %v1126 = vunpack.c.0.s8 %v1125
        %v1127 = vperm.slane %v1119, %v1126
        %v1128 = vrot.slane %v1111, 4
        %v1129 = vsel %vm874, %v1128, %v1107
        %v1130 = vrot.slane %v1107, 4
        %v1131 = vsel %vm874, %v1111, %v1130
        %v1133 = vunpack.c.l.s4 1983009808
        %v1134 = vunpack.c.0.s8 %v1133
        %v1135 = vperm.slane %v1129, %v1134
        %v1137 = vunpack.c.l.s4 1983009808
        %v1138 = vunpack.c.0.s8 %v1137
        %v1139 = vperm.slane %v1131, %v1138
        %v1140 = vrot.slane %v1135, 4
        %v1141 = vsel %vm874, %v1140, %v1123
        %v1142 = vrot.slane %v1123, 4
        %v1143 = vsel %vm874, %v1135, %v1142
        %v1145 = vunpack.c.l.s4 1934713408
        %v1146 = vunpack.c.0.s8 %v1145
        %v1147 = vperm.slane %v1141, %v1146
        %v1149 = vunpack.c.l.s4 1934713408
        %v1150 = vunpack.c.0.s8 %v1149
        %v1151 = vperm.slane %v1143, %v1150
        %v1152 = vrot.slane %v1139, 4
        %v1153 = vsel %vm874, %v1152, %v1127
        %v1154 = vrot.slane %v1127, 4
        %v1155 = vsel %vm874, %v1139, %v1154
        %v1157 = vunpack.c.l.s4 1934713408
        %v1158 = vunpack.c.0.s8 %v1157
        %v1159 = vperm.slane %v1153, %v1158
        %v1161 = vunpack.c.l.s4 1934713408
        %v1162 = vunpack.c.0.s8 %v1161
        %v1163 = vperm.slane %v1155, %v1162
        %v1164 = vrot.slane %v1147, 4
        %v1165 = vsel %vm874, 0.0, %v1164
        %v1166 = vrot.slane %v1151, 4
        %v1167 = vsel %vm874, 0.0, %v1166
        %v1168 = vrot.slane %v1159, 4
        %v1169 = vsel %vm874, 0.0, %v1168
        %v1170 = vrot.slane %v1163, 4
        %v1171 = vsel %vm874, 0.0, %v1170
        %v1172 = vsel %vm874, %v1166, %v1147
        %v1174 = vunpack.c.l.s4 1983009808
        %v1175 = vunpack.c.0.s8 %v1174
        %v1176 = vperm.slane %v1172, %v1175
        %v1177 = vrot.slane %v1167, 4
        %v1178 = vsel %vm874, %v1177, %v1165
        %v1180 = vunpack.c.l.s4 1983009808
        %v1181 = vunpack.c.0.s8 %v1180
        %v1182 = vperm.slane %v1178, %v1181
        %v1183 = vsel %vm874, %v1170, %v1159
        %v1185 = vunpack.c.l.s4 1983009808
        %v1186 = vunpack.c.0.s8 %v1185
        %v1187 = vperm.slane %v1183, %v1186
        %v1188 = vrot.slane %v1171, 4
        %v1189 = vsel %vm874, %v1188, %v1169
        %v1191 = vunpack.c.l.s4 1983009808
        %v1192 = vunpack.c.0.s8 %v1191
        %v1193 = vperm.slane %v1189, %v1192
        %v1194 = vrot.slane %v1182, 4
        %v1195 = vsel %vm874, %v1194, %v1176
        %v1196 = vrot.slane %v1176, 4
        %v1197 = vsel %vm874, %v1182, %v1196
        %v1199 = vunpack.c.l.s4 1934713408
        %v1200 = vunpack.c.0.s8 %v1199
        %v1201 = vperm.slane %v1195, %v1200
        %v1203 = vunpack.c.l.s4 1934713408
        %v1204 = vunpack.c.0.s8 %v1203
        %v1205 = vperm.slane %v1197, %v1204
        %v1206 = vrot.slane %v1193, 4
        %v1207 = vsel %vm874, %v1206, %v1187
        %v1208 = vrot.slane %v1187, 4
        %v1209 = vsel %vm874, %v1193, %v1208
        %v1211 = vunpack.c.l.s4 1934713408
        %v1212 = vunpack.c.0.s8 %v1211
        %v1213 = vperm.slane %v1207, %v1212
        %v1215 = vunpack.c.l.s4 1934713408
        %v1216 = vunpack.c.0.s8 %v1215
        %v1217 = vperm.slane %v1209, %v1216
        %v1218 = vrot.slane %v1213, 4
        %v1219 = vsel %vm874, %v1218, %v1201
        %v1220 = vrot.slane %v1201, 4
        %v1221 = vsel %vm874, %v1213, %v1220
        %v1222 = vrot.slane %v1217, 4
        %v1223 = vsel %vm874, %v1222, %v1205
        %v1224 = vrot.slane %v1205, 4
        %v1225 = vsel %vm874, %v1217, %v1224
        %vm1226 = vcmask 64512
        %v1228 = vsel %vm1226, %v977, 0
        %v1231 = vsel %vm1226, %v1097, 0
        %1233 = vmatpush.xpose.msra.mxu0 0.0
        %1234 = vmatpush.xpose.msra.mxu0 0.0
        %1235 = vmatpush.xpose.msra.mxu0 0.0
        %1236 = vmatpush.xpose.msra.mxu0 0.0
        %1237 = vmatpush.xpose.msra.mxu0 0.0
        %1238 = vmatpush.xpose.msra.mxu0 0.0
        %1239 = vmatpush.xpose.msra.mxu0 0.0
        %1240 = vmatpush.xpose.msra.mxu0 0.0
        %1241 = vmatpush.xpose.msra.mxu0 0.0
        %1242 = vmatpush.xpose.msra.mxu0 0.0
        %1243 = vmatpush.xpose.msra.mxu0 0.0
        %1244 = vmatpush.xpose.msra.mxu0 0.0
        %1245 = vmatpush.xpose.msra.mxu0 0.0
        %1246 = vmatpush.xpose.msra.mxu0 0.0
        %1247 = vmatpush.xpose.msra.mxu0 0.0
        %1248 = vmatpush.xpose.msra.mxu0 %v1231
        %1249 = vmatmul.f32.gmra.mxu0 %v1228
        %v1250 = vpop.f32.mrf.mxu0
        %v1251 = vadd.f32 0.0, %v1250
        %1252 = vdwg.mxu0
        %v1254 = vsel %vm1226, %v979, 0
        %v1257 = vsel %vm1226, %v1099, 0
        %1259 = vmatpush.xpose.msra.mxu0 0.0
        %1260 = vmatpush.xpose.msra.mxu0 0.0
        %1261 = vmatpush.xpose.msra.mxu0 0.0
        %1262 = vmatpush.xpose.msra.mxu0 0.0
        %1263 = vmatpush.xpose.msra.mxu0 0.0
        %1264 = vmatpush.xpose.msra.mxu0 0.0
        %1265 = vmatpush.xpose.msra.mxu0 0.0
        %1266 = vmatpush.xpose.msra.mxu0 0.0
        %1267 = vmatpush.xpose.msra.mxu0 0.0
        %1268 = vmatpush.xpose.msra.mxu0 0.0
        %1269 = vmatpush.xpose.msra.mxu0 0.0
        %1270 = vmatpush.xpose.msra.mxu0 0.0
        %1271 = vmatpush.xpose.msra.mxu0 0.0
        %1272 = vmatpush.xpose.msra.mxu0 0.0
        %1273 = vmatpush.xpose.msra.mxu0 0.0
        %1274 = vmatpush.xpose.msra.mxu0 %v1257
        %1275 = vmatmul.f32.gmra.mxu0 %v1254
        %v1276 = vpop.f32.mrf.mxu0
        %v1277 = vadd.f32 0.0, %v1276
        %1278 = vdwg.mxu0
        %v1280 = vsel %vm1226, %v981, 0
        %v1283 = vsel %vm1226, %v1101, 0
        %1285 = vmatpush.xpose.msra.mxu0 0.0
        %1286 = vmatpush.xpose.msra.mxu0 0.0
        %1287 = vmatpush.xpose.msra.mxu0 0.0
        %1288 = vmatpush.xpose.msra.mxu0 0.0
        %1289 = vmatpush.xpose.msra.mxu0 0.0
        %1290 = vmatpush.xpose.msra.mxu0 0.0
        %1291 = vmatpush.xpose.msra.mxu0 0.0
        %1292 = vmatpush.xpose.msra.mxu0 0.0
        %1293 = vmatpush.xpose.msra.mxu0 0.0
        %1294 = vmatpush.xpose.msra.mxu0 0.0
        %1295 = vmatpush.xpose.msra.mxu0 0.0
        %1296 = vmatpush.xpose.msra.mxu0 0.0
        %1297 = vmatpush.xpose.msra.mxu0 0.0
        %1298 = vmatpush.xpose.msra.mxu0 0.0
        %1299 = vmatpush.xpose.msra.mxu0 0.0
        %1300 = vmatpush.xpose.msra.mxu0 %v1283
        %1301 = vmatmul.f32.gmra.mxu0 %v1280
        %v1302 = vpop.f32.mrf.mxu0
        %v1303 = vadd.f32 0.0, %v1302
        %1304 = vdwg.mxu0
        %v1306 = vsel %vm1226, %v983, 0
        %v1309 = vsel %vm1226, %v1103, 0
        %1311 = vmatpush.xpose.msra.mxu0 0.0
        %1312 = vmatpush.xpose.msra.mxu0 0.0
        %1313 = vmatpush.xpose.msra.mxu0 0.0
        %1314 = vmatpush.xpose.msra.mxu0 0.0
        %1315 = vmatpush.xpose.msra.mxu0 0.0
        %1316 = vmatpush.xpose.msra.mxu0 0.0
        %1317 = vmatpush.xpose.msra.mxu0 0.0
        %1318 = vmatpush.xpose.msra.mxu0 0.0
        %1319 = vmatpush.xpose.msra.mxu0 0.0
        %1320 = vmatpush.xpose.msra.mxu0 0.0
        %1321 = vmatpush.xpose.msra.mxu0 0.0
        %1322 = vmatpush.xpose.msra.mxu0 0.0
        %1323 = vmatpush.xpose.msra.mxu0 0.0
        %1324 = vmatpush.xpose.msra.mxu0 0.0
        %1325 = vmatpush.xpose.msra.mxu0 0.0
        %1326 = vmatpush.xpose.msra.mxu0 %v1309
        %1327 = vmatmul.f32.gmra.mxu0 %v1306
        %v1328 = vpop.f32.mrf.mxu0
        %v1329 = vadd.f32 0.0, %v1328
        %1330 = vdwg.mxu0
        %v1331 = vsel %vm1226, %v1251, -inf
        %1332 = vmax.xlane.f32.xlu0 %v1331
        %v1333 = vpop.xlane.xlu0 %1332
        %v1334 = vsel %vm1226, %v1277, -inf
        %1335 = vmax.xlane.f32.xlu0 %v1334
        %v1336 = vpop.xlane.xlu0 %1335
        %v1337 = vsel %vm1226, %v1303, -inf
        %1338 = vmax.xlane.f32.xlu0 %v1337
        %v1339 = vpop.xlane.xlu0 %1338
        %v1340 = vsel %vm1226, %v1329, -inf
        %1341 = vmax.xlane.f32.xlu0 %v1340
        %v1342 = vpop.xlane.xlu0 %1341
        %v1343 = vsub.f32 %v1251, %v1333
        %v1344 = vsub.f32 %v1277, %v1336
        %v1345 = vsub.f32 %v1303, %v1339
        %v1346 = vsub.f32 %v1329, %v1342
        %v1347 = vmul.f32 %v1343, 1.442695
        %v1348 = vpow.pop %v1347
        %v1349 = vmul.f32 %v1344, 1.442695
        %v1350 = vpow.pop %v1349
        %v1351 = vmul.f32 %v1345, 1.442695
        %v1352 = vpow.pop %v1351
        %v1353 = vmul.f32 %v1346, 1.442695
        %v1354 = vpow.pop %v1353
        %v1355 = vsel %vm1226, %v1348, 0.0
        %1356 = vadd.xlane.f32.xlu0 %v1355
        %v1357 = vpop.xlane.xlu0 %1356
        %v1358 = vsel %vm1226, %v1350, 0.0
        %1359 = vadd.xlane.f32.xlu0 %v1358
        %v1360 = vpop.xlane.xlu0 %1359
        %v1361 = vsel %vm1226, %v1352, 0.0
        %1362 = vadd.xlane.f32.xlu0 %v1361
        %v1363 = vpop.xlane.xlu0 %1362
        %v1364 = vsel %vm1226, %v1354, 0.0
        %1365 = vadd.xlane.f32.xlu0 %v1364
        %v1366 = vpop.xlane.xlu0 %1365
        %v1367 = vrcp.pop %v1357
        %v1368 = vmul.f32 %v1357, %v1367
        %v1369 = vsub.f32 1.0, %v1368
        %v1370 = vmul.f32 %v1367, %v1369
        %v1371 = vadd.f32 %v1367, %v1370
        %vm1372 = vweird.f32 %v1357
        %vm1373 = vweird.f32 %v1367
        %vm1374 = vmor %vm1372, %vm1373
        %v1375 = vsel %vm1374, %v1367, %v1371
        %v1376 = vand.u32 2147483647, %v1357
        %vm1377 = vcmp.eq.f32.partialorder %v1376, 8.507059e+37
        %v1378 = vand.u32 %v1357, 2147483648
        %v1379 = vor.u32 1.1754944e-38, %v1378
        %v1380 = vsel %vm1377, %v1379, %v1375
        %v1381 = vmul.f32 %v1348, %v1380
        %v1382 = vrcp.pop %v1360
        %v1383 = vmul.f32 %v1360, %v1382
        %v1384 = vsub.f32 1.0, %v1383
        %v1385 = vmul.f32 %v1382, %v1384
        %v1386 = vadd.f32 %v1382, %v1385
        %vm1387 = vweird.f32 %v1360
        %vm1388 = vweird.f32 %v1382
        %vm1389 = vmor %vm1387, %vm1388
        %v1390 = vsel %vm1389, %v1382, %v1386
        %v1391 = vand.u32 2147483647, %v1360
        %vm1392 = vcmp.eq.f32.partialorder %v1391, 8.507059e+37
        %v1393 = vand.u32 %v1360, 2147483648
        %v1394 = vor.u32 1.1754944e-38, %v1393
        %v1395 = vsel %vm1392, %v1394, %v1390
        %v1396 = vmul.f32 %v1350, %v1395
        %v1397 = vrcp.pop %v1363
        %v1398 = vmul.f32 %v1363, %v1397
        %v1399 = vsub.f32 1.0, %v1398
        %v1400 = vmul.f32 %v1397, %v1399
        %v1401 = vadd.f32 %v1397, %v1400
        %vm1402 = vweird.f32 %v1363
        %vm1403 = vweird.f32 %v1397
        %vm1404 = vmor %vm1402, %vm1403
        %v1405 = vsel %vm1404, %v1397, %v1401
        %v1406 = vand.u32 2147483647, %v1363
        %vm1407 = vcmp.eq.f32.partialorder %v1406, 8.507059e+37
        %v1408 = vand.u32 %v1363, 2147483648
        %v1409 = vor.u32 1.1754944e-38, %v1408
        %v1410 = vsel %vm1407, %v1409, %v1405
        %v1411 = vmul.f32 %v1352, %v1410
        %v1412 = vrcp.pop %v1366
        %v1413 = vmul.f32 %v1366, %v1412
        %v1414 = vsub.f32 1.0, %v1413
        %v1415 = vmul.f32 %v1412, %v1414
        %v1416 = vadd.f32 %v1412, %v1415
        %vm1417 = vweird.f32 %v1366
        %vm1418 = vweird.f32 %v1412
        %vm1419 = vmor %vm1417, %vm1418
        %v1420 = vsel %vm1419, %v1412, %v1416
        %v1421 = vand.u32 2147483647, %v1366
        %vm1422 = vcmp.eq.f32.partialorder %v1421, 8.507059e+37
        %v1423 = vand.u32 %v1366, 2147483648
        %v1424 = vor.u32 1.1754944e-38, %v1423
        %v1425 = vsel %vm1422, %v1424, %v1420
        %v1426 = vmul.f32 %v1354, %v1425
        %v1428 = vsel %vm1226, %v1381, 0
        %1430 = vmatpush.msra.mxu0 0.0
        %1431 = vmatpush.msra.mxu0 0.0
        %1432 = vmatpush.msra.mxu0 0.0
        %1433 = vmatpush.msra.mxu0 0.0
        %1434 = vmatpush.msra.mxu0 0.0
        %1435 = vmatpush.msra.mxu0 0.0
        %1436 = vmatpush.msra.mxu0 0.0
        %1437 = vmatpush.msra.mxu0 0.0
        %1438 = vmatpush.msra.mxu0 0.0
        %1439 = vmatpush.msra.mxu0 0.0
        %1440 = vmatpush.msra.mxu0 0.0
        %1441 = vmatpush.msra.mxu0 0.0
        %1442 = vmatpush.msra.mxu0 0.0
        %1443 = vmatpush.msra.mxu0 0.0
        %1444 = vmatpush.msra.mxu0 0.0
        %1445 = vmatpush.msra.mxu0 %v1219
        %1446 = vmatmul.f32.gmra.mxu0 %v1428
        %v1447 = vpop.f32.mrf.mxu0
        %v1448 = vadd.f32 0.0, %v1447
        %1449 = vdwg.mxu0
        %v1451 = vsel %vm1226, %v1396, 0
        %1453 = vmatpush.msra.mxu0 0.0
        %1454 = vmatpush.msra.mxu0 0.0
        %1455 = vmatpush.msra.mxu0 0.0
        %1456 = vmatpush.msra.mxu0 0.0
        %1457 = vmatpush.msra.mxu0 0.0
        %1458 = vmatpush.msra.mxu0 0.0
        %1459 = vmatpush.msra.mxu0 0.0
        %1460 = vmatpush.msra.mxu0 0.0
        %1461 = vmatpush.msra.mxu0 0.0
        %1462 = vmatpush.msra.mxu0 0.0
        %1463 = vmatpush.msra.mxu0 0.0
        %1464 = vmatpush.msra.mxu0 0.0
        %1465 = vmatpush.msra.mxu0 0.0
        %1466 = vmatpush.msra.mxu0 0.0
        %1467 = vmatpush.msra.mxu0 0.0
        %1468 = vmatpush.msra.mxu0 %v1221
        %1469 = vmatmul.f32.gmra.mxu0 %v1451
        %v1470 = vpop.f32.mrf.mxu0
        %v1471 = vadd.f32 0.0, %v1470
        %1472 = vdwg.mxu0
        %v1474 = vsel %vm1226, %v1411, 0
        %1476 = vmatpush.msra.mxu0 0.0
        %1477 = vmatpush.msra.mxu0 0.0
        %1478 = vmatpush.msra.mxu0 0.0
        %1479 = vmatpush.msra.mxu0 0.0
        %1480 = vmatpush.msra.mxu0 0.0
        %1481 = vmatpush.msra.mxu0 0.0
        %1482 = vmatpush.msra.mxu0 0.0
        %1483 = vmatpush.msra.mxu0 0.0
        %1484 = vmatpush.msra.mxu0 0.0
        %1485 = vmatpush.msra.mxu0 0.0
        %1486 = vmatpush.msra.mxu0 0.0
        %1487 = vmatpush.msra.mxu0 0.0
        %1488 = vmatpush.msra.mxu0 0.0
        %1489 = vmatpush.msra.mxu0 0.0
        %1490 = vmatpush.msra.mxu0 0.0
        %1491 = vmatpush.msra.mxu0 %v1223
        %1492 = vmatmul.f32.gmra.mxu0 %v1474
        %v1493 = vpop.f32.mrf.mxu0
        %v1494 = vadd.f32 0.0, %v1493
        %1495 = vdwg.mxu0
        %v1497 = vsel %vm1226, %v1426, 0
        %1499 = vmatpush.msra.mxu0 0.0
        %1500 = vmatpush.msra.mxu0 0.0
        %1501 = vmatpush.msra.mxu0 0.0
        %1502 = vmatpush.msra.mxu0 0.0
        %1503 = vmatpush.msra.mxu0 0.0
        %1504 = vmatpush.msra.mxu0 0.0
        %1505 = vmatpush.msra.mxu0 0.0
        %1506 = vmatpush.msra.mxu0 0.0
        %1507 = vmatpush.msra.mxu0 0.0
        %1508 = vmatpush.msra.mxu0 0.0
        %1509 = vmatpush.msra.mxu0 0.0
        %1510 = vmatpush.msra.mxu0 0.0
        %1511 = vmatpush.msra.mxu0 0.0
        %1512 = vmatpush.msra.mxu0 0.0
        %1513 = vmatpush.msra.mxu0 0.0
        %1514 = vmatpush.msra.mxu0 %v1225
        %1515 = vmatmul.f32.gmra.mxu0 %v1497
        %v1516 = vpop.f32.mrf.mxu0
        %v1517 = vadd.f32 0.0, %v1516
        %1518 = vdwg.mxu0
        %v1519 = vsel %vm1226, %v1381, 0.0
        %v1520 = vsel %vm1226, %v1396, 0.0
        %v1521 = vadd.f32 %v1519, %v1520
        %v1522 = vsel %vm1226, %v1411, 0.0
        %v1523 = vadd.f32 %v1521, %v1522
        %v1524 = vsel %vm1226, %v1426, 0.0
        %v1525 = vadd.f32 %v1523, %v1524
        %v1526 = vrcp.pop 4.0
        %v1527 = vmul.f32 4.0, %v1526
        %v1528 = vsub.f32 1.0, %v1527
        %v1529 = vmul.f32 %v1526, %v1528
        %v1530 = vadd.f32 %v1526, %v1529
        %vm1531 = vweird.f32 %v1526
        %v1532 = vsel %vm1531, %v1526, %v1530
        %v1533 = vmul.f32 %v1525, %v1532
        %v1534 = vrot.slane %v1494, 4
        %v1535 = vsel %vm874, %v1534, %v1448
        %v1536 = vrot.slane %v1448, 4
        %v1537 = vsel %vm874, %v1494, %v1536
        %v1539 = vunpack.c.l.s4 1983009808
        %v1540 = vunpack.c.0.s8 %v1539
        %v1541 = vperm.slane %v1535, %v1540
        %v1543 = vunpack.c.l.s4 1983009808
        %v1544 = vunpack.c.0.s8 %v1543
        %v1545 = vperm.slane %v1537, %v1544
        %v1546 = vrot.slane %v1517, 4
        %v1547 = vsel %vm874, %v1546, %v1471
        %v1548 = vrot.slane %v1471, 4
        %v1549 = vsel %vm874, %v1517, %v1548
        %v1551 = vunpack.c.l.s4 1983009808
        %v1552 = vunpack.c.0.s8 %v1551
        %v1553 = vperm.slane %v1547, %v1552
        %v1555 = vunpack.c.l.s4 1983009808
        %v1556 = vunpack.c.0.s8 %v1555
        %v1557 = vperm.slane %v1549, %v1556
        %v1558 = vrot.slane %v1553, 4
        %v1559 = vsel %vm874, %v1558, %v1541
        %v1560 = vrot.slane %v1541, 4
        %v1561 = vsel %vm874, %v1553, %v1560
        %v1563 = vunpack.c.l.s4 1934713408
        %v1564 = vunpack.c.0.s8 %v1563
        %v1565 = vperm.slane %v1559, %v1564
        %v1567 = vunpack.c.l.s4 1934713408
        %v1568 = vunpack.c.0.s8 %v1567
        %v1569 = vperm.slane %v1561, %v1568
        %v1570 = vrot.slane %v1557, 4
        %v1571 = vsel %vm874, %v1570, %v1545
        %v1572 = vrot.slane %v1545, 4
        %v1573 = vsel %vm874, %v1557, %v1572
        %v1575 = vunpack.c.l.s4 1934713408
        %v1576 = vunpack.c.0.s8 %v1575
        %v1577 = vperm.slane %v1571, %v1576
        %v1579 = vunpack.c.l.s4 1934713408
        %v1580 = vunpack.c.0.s8 %v1579
        %v1581 = vperm.slane %v1573, %v1580
        %v1582 = vrot.slane %v1565, 4
        %v1583 = vsel %vm874, 0.0, %v1582
        %v1584 = vrot.slane %v1569, 4
        %v1585 = vsel %vm874, 0.0, %v1584
        %v1586 = vrot.slane %v1577, 4
        %v1587 = vsel %vm874, 0.0, %v1586
        %v1588 = vrot.slane %v1581, 4
        %v1589 = vsel %vm874, 0.0, %v1588
        %v1590 = vsel %vm874, %v1584, %v1565
        %v1592 = vunpack.c.l.s4 1983009808
        %v1593 = vunpack.c.0.s8 %v1592
        %v1594 = vperm.slane %v1590, %v1593
        %v1595 = vrot.slane %v1585, 4
        %v1596 = vsel %vm874, %v1595, %v1583
        %v1598 = vunpack.c.l.s4 1983009808
        %v1599 = vunpack.c.0.s8 %v1598
        %v1600 = vperm.slane %v1596, %v1599
        %v1601 = vsel %vm874, %v1588, %v1577
        %v1603 = vunpack.c.l.s4 1983009808
        %v1604 = vunpack.c.0.s8 %v1603
        %v1605 = vperm.slane %v1601, %v1604
        %v1606 = vrot.slane %v1589, 4
        %v1607 = vsel %vm874, %v1606, %v1587
        %v1609 = vunpack.c.l.s4 1983009808
        %v1610 = vunpack.c.0.s8 %v1609
        %v1611 = vperm.slane %v1607, %v1610
        %v1612 = vrot.slane %v1600, 4
        %v1613 = vsel %vm874, %v1612, %v1594
        %v1614 = vrot.slane %v1594, 4
        %v1615 = vsel %vm874, %v1600, %v1614
        %v1617 = vunpack.c.l.s4 1934713408
        %v1618 = vunpack.c.0.s8 %v1617
        %v1619 = vperm.slane %v1613, %v1618
        %v1621 = vunpack.c.l.s4 1934713408
        %v1622 = vunpack.c.0.s8 %v1621
        %v1623 = vperm.slane %v1615, %v1622
        %v1624 = vrot.slane %v1611, 4
        %v1625 = vsel %vm874, %v1624, %v1605
        %v1626 = vrot.slane %v1605, 4
        %v1627 = vsel %vm874, %v1611, %v1626
        %v1629 = vunpack.c.l.s4 1934713408
        %v1630 = vunpack.c.0.s8 %v1629
        %v1631 = vperm.slane %v1625, %v1630
        %v1633 = vunpack.c.l.s4 1934713408
        %v1634 = vunpack.c.0.s8 %v1633
        %v1635 = vperm.slane %v1627, %v1634
        %v1636 = vrot.slane %v1631, 4
        %v1637 = vsel %vm874, %v1636, %v1619
        %v1638 = vrot.slane %v1619, 4
        %v1639 = vsel %vm874, %v1631, %v1638
        %v1640 = vrot.slane %v1635, 4
        %v1641 = vsel %vm874, %v1640, %v1623
        %v1642 = vrot.slane %v1623, 4
        %v1643 = vsel %vm874, %v1635, %v1642
        %1645 = vrot.lane.b32.xlu0 %v1639, 8
        %v1646 = vpop.permute.xlu0 %1645
        %1649 = vrot.lane.b32.xlu0 %v1641, 16
        %v1650 = vpop.permute.xlu0 %1649
        %1653 = vrot.lane.b32.xlu0 %v1643, 24
        %v1654 = vpop.permute.xlu0 %1653
        %v1656 = vsel %vm1226, %v1637, %v1646
        %vm1657 = vcmask 130048
        %v1658 = vsel %vm1657, %v1656, %v1650
        %vm1659 = vcmask 195584
        %v1660 = vsel %vm1659, %v1658, %v1654
        %v1661 = vld [vmem:[#allocation11] sm:$0xff]
        %v1662 = vld [vmem:[#allocation11 + $0x8] sm:$0xff]
        %v1663 = vld [vmem:[#allocation11 + $0x10] sm:$0xff]
        %v1664 = vld [vmem:[#allocation11 + $0x18] sm:$0xff]
        %v1665 = vld [vmem:[%s8] sm:$0x1]
        %v1667 = vperm.slane %v1665, 0
        %v1670 = vsel %vm807, %v1660, 0
        %1672 = vmatpush.msra.mxu0 0.0
        %1673 = vmatpush.msra.mxu0 0.0
        %1674 = vmatpush.msra.mxu0 0.0
        %1675 = vmatpush.msra.mxu0 0.0
        %1676 = vmatpush.msra.mxu0 0.0
        %1677 = vmatpush.msra.mxu0 0.0
        %1678 = vmatpush.msra.mxu0 0.0
        %1679 = vmatpush.msra.mxu0 0.0
        %1680 = vmatpush.msra.mxu0 0.0
        %1681 = vmatpush.msra.mxu0 0.0
        %1682 = vmatpush.msra.mxu0 0.0
        %1683 = vmatpush.msra.mxu0 0.0
        %1684 = vmatpush.msra.mxu0 %v1664
        %1685 = vmatpush.msra.mxu0 %v1663
        %1686 = vmatpush.msra.mxu0 %v1662
        %1687 = vmatpush.msra.mxu0 %v1661
        %1688 = vmatmul.f32.gmra.mxu0 %v1670
        %v1689 = vpop.f32.mrf.mxu0
        %v1690 = vadd.f32 %v1667, %v1689
        %1691 = vdwg.mxu0
        %1692 = vst.msk [vmem:[%s780] sm:$0xff] %vm807, %v1690
        %1693 = vst.msk [vmem:[%s787] sm:$0xff] %vm1226, %v1533
        %v1694 = vld [vmem:[#allocation13] sm:$0xff]
        %v1695 = vld [vmem:[#allocation13 + $0x8] sm:$0xff]
        %v1696 = vld [vmem:[#allocation13 + $0x10] sm:$0xff]
        %v1697 = vld [vmem:[#allocation13 + $0x18] sm:$0xff]
        %v1698 = vld [vmem:[%s11] sm:$0x1]
        %v1700 = vperm.slane %v1698, 0
        %1702 = vmatpush.msra.mxu0 0.0
        %1703 = vmatpush.msra.mxu0 0.0
        %1704 = vmatpush.msra.mxu0 0.0
        %1705 = vmatpush.msra.mxu0 0.0
        %1706 = vmatpush.msra.mxu0 0.0
        %1707 = vmatpush.msra.mxu0 0.0
        %1708 = vmatpush.msra.mxu0 0.0
        %1709 = vmatpush.msra.mxu0 0.0
        %1710 = vmatpush.msra.mxu0 0.0
        %1711 = vmatpush.msra.mxu0 0.0
        %1712 = vmatpush.msra.mxu0 0.0
        %1713 = vmatpush.msra.mxu0 0.0
        %1714 = vmatpush.msra.mxu0 %v1697
        %1715 = vmatpush.msra.mxu0 %v1696
        %1716 = vmatpush.msra.mxu0 %v1695
        %1717 = vmatpush.msra.mxu0 %v1694
        %1718 = vmatmul.f32.gmra.mxu0 %v809
        %v1719 = vpop.f32.mrf.mxu0
        %v1720 = vadd.f32 %v1700, %v1719
        %1721 = vdwg.mxu0
        %v1722 = vmul.f32 %v1720, 0.35355338
        %v1723 = vld [vmem:[#allocation14] sm:$0xff]
        %v1724 = vld [vmem:[#allocation14 + $0x8] sm:$0xff]
        %v1725 = vld [vmem:[#allocation14 + $0x10] sm:$0xff]
        %v1726 = vld [vmem:[#allocation14 + $0x18] sm:$0xff]
        %v1727 = vld [vmem:[%s12] sm:$0x1]
        %v1729 = vperm.slane %v1727, 0
        %v1732 = vsel %vm807, %v1690, 0
        %1734 = vmatpush.msra.mxu0 0.0
        %1735 = vmatpush.msra.mxu0 0.0
        %1736 = vmatpush.msra.mxu0 0.0
        %1737 = vmatpush.msra.mxu0 0.0
        %1738 = vmatpush.msra.mxu0 0.0
        %1739 = vmatpush.msra.mxu0 0.0
        %1740 = vmatpush.msra.mxu0 0.0
        %1741 = vmatpush.msra.mxu0 0.0
        %1742 = vmatpush.msra.mxu0 0.0
        %1743 = vmatpush.msra.mxu0 0.0
        %1744 = vmatpush.msra.mxu0 0.0
        %1745 = vmatpush.msra.mxu0 0.0
        %1746 = vmatpush.msra.mxu0 %v1726
        %1747 = vmatpush.msra.mxu0 %v1725
        %1748 = vmatpush.msra.mxu0 %v1724
        %1749 = vmatpush.msra.mxu0 %v1723
        %1750 = vmatmul.f32.gmra.mxu0 %v1732
        %v1751 = vpop.f32.mrf.mxu0
        %v1752 = vadd.f32 %v1729, %v1751
        %1753 = vdwg.mxu0
        %1755 = vrot.lane.b32.xlu0 %v1722, 120
        %v1756 = vpop.permute.xlu0 %1755
        %1758 = vrot.lane.b32.xlu0 %v1722, 112
        %v1759 = vpop.permute.xlu0 %1758
        %1761 = vrot.lane.b32.xlu0 %v1722, 104
        %v1762 = vpop.permute.xlu0 %1761
        %v1764 = vrot.slane %v1759, 4
        %v1765 = vsel %vm874, %v1764, %v1722
        %v1766 = vrot.slane %v1722, 4
        %v1767 = vsel %vm874, %v1759, %v1766
        %v1769 = vunpack.c.l.s4 1983009808
        %v1770 = vunpack.c.0.s8 %v1769
        %v1771 = vperm.slane %v1765, %v1770
        %v1773 = vunpack.c.l.s4 1983009808
        %v1774 = vunpack.c.0.s8 %v1773
        %v1775 = vperm.slane %v1767, %v1774
        %v1776 = vrot.slane %v1762, 4
        %v1777 = vsel %vm874, %v1776, %v1756
        %v1778 = vrot.slane %v1756, 4
        %v1779 = vsel %vm874, %v1762, %v1778
        %v1781 = vunpack.c.l.s4 1983009808
        %v1782 = vunpack.c.0.s8 %v1781
        %v1783 = vperm.slane %v1777, %v1782
        %v1785 = vunpack.c.l.s4 1983009808
        %v1786 = vunpack.c.0.s8 %v1785
        %v1787 = vperm.slane %v1779, %v1786
        %v1788 = vrot.slane %v1783, 4
        %v1789 = vsel %vm874, %v1788, %v1771
        %v1790 = vrot.slane %v1771, 4
        %v1791 = vsel %vm874, %v1783, %v1790
        %v1793 = vunpack.c.l.s4 1934713408
        %v1794 = vunpack.c.0.s8 %v1793
        %v1795 = vperm.slane %v1789, %v1794
        %v1797 = vunpack.c.l.s4 1934713408
        %v1798 = vunpack.c.0.s8 %v1797
        %v1799 = vperm.slane %v1791, %v1798
        %v1800 = vrot.slane %v1787, 4
        %v1801 = vsel %vm874, %v1800, %v1775
        %v1802 = vrot.slane %v1775, 4
        %v1803 = vsel %vm874, %v1787, %v1802
        %v1805 = vunpack.c.l.s4 1934713408
        %v1806 = vunpack.c.0.s8 %v1805
        %v1807 = vperm.slane %v1801, %v1806
        %v1809 = vunpack.c.l.s4 1934713408
        %v1810 = vunpack.c.0.s8 %v1809
        %v1811 = vperm.slane %v1803, %v1810
        %v1812 = vrot.slane %v1795, 4
        %v1813 = vsel %vm874, 0.0, %v1812
        %v1814 = vrot.slane %v1799, 4
        %v1815 = vsel %vm874, 0.0, %v1814
        %v1816 = vrot.slane %v1807, 4
        %v1817 = vsel %vm874, 0.0, %v1816
        %v1818 = vrot.slane %v1811, 4
        %v1819 = vsel %vm874, 0.0, %v1818
        %v1820 = vsel %vm874, %v1814, %v1795
        %v1822 = vunpack.c.l.s4 1983009808
        %v1823 = vunpack.c.0.s8 %v1822
        %v1824 = vperm.slane %v1820, %v1823
        %v1825 = vrot.slane %v1815, 4
        %v1826 = vsel %vm874, %v1825, %v1813
        %v1828 = vunpack.c.l.s4 1983009808
        %v1829 = vunpack.c.0.s8 %v1828
        %v1830 = vperm.slane %v1826, %v1829
        %v1831 = vsel %vm874, %v1818, %v1807
        %v1833 = vunpack.c.l.s4 1983009808
        %v1834 = vunpack.c.0.s8 %v1833
        %v1835 = vperm.slane %v1831, %v1834
        %v1836 = vrot.slane %v1819, 4
        %v1837 = vsel %vm874, %v1836, %v1817
        %v1839 = vunpack.c.l.s4 1983009808
        %v1840 = vunpack.c.0.s8 %v1839
        %v1841 = vperm.slane %v1837, %v1840
        %v1842 = vrot.slane %v1830, 4
        %v1843 = vsel %vm874, %v1842, %v1824
        %v1844 = vrot.slane %v1824, 4
        %v1845 = vsel %vm874, %v1830, %v1844
        %v1847 = vunpack.c.l.s4 1934713408
        %v1848 = vunpack.c.0.s8 %v1847
        %v1849 = vperm.slane %v1843, %v1848
        %v1851 = vunpack.c.l.s4 1934713408
        %v1852 = vunpack.c.0.s8 %v1851
        %v1853 = vperm.slane %v1845, %v1852
        %v1854 = vrot.slane %v1841, 4
        %v1855 = vsel %vm874, %v1854, %v1835
        %v1856 = vrot.slane %v1835, 4
        %v1857 = vsel %vm874, %v1841, %v1856
        %v1859 = vunpack.c.l.s4 1934713408
        %v1860 = vunpack.c.0.s8 %v1859
        %v1861 = vperm.slane %v1855, %v1860
        %v1863 = vunpack.c.l.s4 1934713408
        %v1864 = vunpack.c.0.s8 %v1863
        %v1865 = vperm.slane %v1857, %v1864
        %v1866 = vrot.slane %v1861, 4
        %v1867 = vsel %vm874, %v1866, %v1849
        %v1868 = vrot.slane %v1849, 4
        %v1869 = vsel %vm874, %v1861, %v1868
        %v1870 = vrot.slane %v1865, 4
        %v1871 = vsel %vm874, %v1870, %v1853
        %v1872 = vrot.slane %v1853, 4
        %v1873 = vsel %vm874, %v1865, %v1872
        %1875 = vrot.lane.b32.xlu0 %v1752, 120
        %v1876 = vpop.permute.xlu0 %1875
        %1878 = vrot.lane.b32.xlu0 %v1752, 112
        %v1879 = vpop.permute.xlu0 %1878
        %1881 = vrot.lane.b32.xlu0 %v1752, 104
        %v1882 = vpop.permute.xlu0 %1881
        %v1884 = vrot.slane %v1879, 4
        %v1885 = vsel %vm874, %v1884, %v1752
        %v1886 = vrot.slane %v1752, 4
        %v1887 = vsel %vm874, %v1879, %v1886
        %v1889 = vunpack.c.l.s4 1983009808
        %v1890 = vunpack.c.0.s8 %v1889
        %v1891 = vperm.slane %v1885, %v1890
        %v1893 = vunpack.c.l.s4 1983009808
        %v1894 = vunpack.c.0.s8 %v1893
        %v1895 = vperm.slane %v1887, %v1894
        %v1896 = vrot.slane %v1882, 4
        %v1897 = vsel %vm874, %v1896, %v1876
        %v1898 = vrot.slane %v1876, 4
        %v1899 = vsel %vm874, %v1882, %v1898
        %v1901 = vunpack.c.l.s4 1983009808
        %v1902 = vunpack.c.0.s8 %v1901
        %v1903 = vperm.slane %v1897, %v1902
        %v1905 = vunpack.c.l.s4 1983009808
        %v1906 = vunpack.c.0.s8 %v1905
        %v1907 = vperm.slane %v1899, %v1906
        %v1908 = vrot.slane %v1903, 4
        %v1909 = vsel %vm874, %v1908, %v1891
        %v1910 = vrot.slane %v1891, 4
        %v1911 = vsel %vm874, %v1903, %v1910
        %v1913 = vunpack.c.l.s4 1934713408
        %v1914 = vunpack.c.0.s8 %v1913
        %v1915 = vperm.slane %v1909, %v1914
        %v1917 = vunpack.c.l.s4 1934713408
        %v1918 = vunpack.c.0.s8 %v1917
        %v1919 = vperm.slane %v1911, %v1918
        %v1920 = vrot.slane %v1907, 4
        %v1921 = vsel %vm874, %v1920, %v1895
        %v1922 = vrot.slane %v1895, 4
        %v1923 = vsel %vm874, %v1907, %v1922
        %v1925 = vunpack.c.l.s4 1934713408
        %v1926 = vunpack.c.0.s8 %v1925
        %v1927 = vperm.slane %v1921, %v1926
        %v1929 = vunpack.c.l.s4 1934713408
        %v1930 = vunpack.c.0.s8 %v1929
        %v1931 = vperm.slane %v1923, %v1930
        %v1932 = vrot.slane %v1915, 4
        %v1933 = vsel %vm874, 0.0, %v1932
        %v1934 = vrot.slane %v1919, 4
        %v1935 = vsel %vm874, 0.0, %v1934
        %v1936 = vrot.slane %v1927, 4
        %v1937 = vsel %vm874, 0.0, %v1936
        %v1938 = vrot.slane %v1931, 4
        %v1939 = vsel %vm874, 0.0, %v1938
        %v1940 = vsel %vm874, %v1934, %v1915
        %v1942 = vunpack.c.l.s4 1983009808
        %v1943 = vunpack.c.0.s8 %v1942
        %v1944 = vperm.slane %v1940, %v1943
        %v1945 = vrot.slane %v1935, 4
        %v1946 = vsel %vm874, %v1945, %v1933
        %v1948 = vunpack.c.l.s4 1983009808
        %v1949 = vunpack.c.0.s8 %v1948
        %v1950 = vperm.slane %v1946, %v1949
        %v1951 = vsel %vm874, %v1938, %v1927
        %v1953 = vunpack.c.l.s4 1983009808
        %v1954 = vunpack.c.0.s8 %v1953
        %v1955 = vperm.slane %v1951, %v1954
        %v1956 = vrot.slane %v1939, 4
        %v1957 = vsel %vm874, %v1956, %v1937
        %v1959 = vunpack.c.l.s4 1983009808
        %v1960 = vunpack.c.0.s8 %v1959
        %v1961 = vperm.slane %v1957, %v1960
        %v1962 = vrot.slane %v1950, 4
        %v1963 = vsel %vm874, %v1962, %v1944
        %v1964 = vrot.slane %v1944, 4
        %v1965 = vsel %vm874, %v1950, %v1964
        %v1967 = vunpack.c.l.s4 1934713408
        %v1968 = vunpack.c.0.s8 %v1967
        %v1969 = vperm.slane %v1963, %v1968
        %v1971 = vunpack.c.l.s4 1934713408
        %v1972 = vunpack.c.0.s8 %v1971
        %v1973 = vperm.slane %v1965, %v1972
        %v1974 = vrot.slane %v1961, 4
        %v1975 = vsel %vm874, %v1974, %v1955
        %v1976 = vrot.slane %v1955, 4
        %v1977 = vsel %vm874, %v1961, %v1976
        %v1979 = vunpack.c.l.s4 1934713408
        %v1980 = vunpack.c.0.s8 %v1979
        %v1981 = vperm.slane %v1975, %v1980
        %v1983 = vunpack.c.l.s4 1934713408
        %v1984 = vunpack.c.0.s8 %v1983
        %v1985 = vperm.slane %v1977, %v1984
        %v1986 = vrot.slane %v1981, 4
        %v1987 = vsel %vm874, %v1986, %v1969
        %v1988 = vrot.slane %v1969, 4
        %v1989 = vsel %vm874, %v1981, %v1988
        %v1990 = vrot.slane %v1985, 4
        %v1991 = vsel %vm874, %v1990, %v1973
        %v1992 = vrot.slane %v1973, 4
        %v1993 = vsel %vm874, %v1985, %v1992
        %1995 = vrot.lane.b32.xlu0 %v1720, 120
        %v1996 = vpop.permute.xlu0 %1995
        %1997 = vrot.lane.b32.xlu0 %v1720, 112
        %v1998 = vpop.permute.xlu0 %1997
        %1999 = vrot.lane.b32.xlu0 %v1720, 104
        %v2000 = vpop.permute.xlu0 %1999
        %2001 = vrot.lane.b32.xlu0 %v1720, 96
        %v2002 = vpop.permute.xlu0 %2001
        %2003 = vrot.lane.b32.xlu0 %v1996, 96
        %v2004 = vpop.permute.xlu0 %2003
        %2005 = vrot.lane.b32.xlu0 %v1998, 96
        %v2006 = vpop.permute.xlu0 %2005
        %2007 = vrot.lane.b32.xlu0 %v2000, 96
        %v2008 = vpop.permute.xlu0 %2007
        %v2013 = vrot.slane %v2006, 4
        %v2014 = vsel %vm874, %v2013, %v2002
        %v2015 = vrot.slane %v2002, 4
        %v2016 = vsel %vm874, %v2006, %v2015
        %v2018 = vunpack.c.l.s4 1983009808
        %v2019 = vunpack.c.0.s8 %v2018
        %v2020 = vperm.slane %v2014, %v2019
        %v2022 = vunpack.c.l.s4 1983009808
        %v2023 = vunpack.c.0.s8 %v2022
        %v2024 = vperm.slane %v2016, %v2023
        %v2025 = vrot.slane %v2008, 4
        %v2026 = vsel %vm874, %v2025, %v2004
        %v2027 = vrot.slane %v2004, 4
        %v2028 = vsel %vm874, %v2008, %v2027
        %v2030 = vunpack.c.l.s4 1983009808
        %v2031 = vunpack.c.0.s8 %v2030
        %v2032 = vperm.slane %v2026, %v2031
        %v2034 = vunpack.c.l.s4 1983009808
        %v2035 = vunpack.c.0.s8 %v2034
        %v2036 = vperm.slane %v2028, %v2035
        %v2037 = vrot.slane %v2032, 4
        %v2038 = vsel %vm874, %v2037, %v2020
        %v2039 = vrot.slane %v2020, 4
        %v2040 = vsel %vm874, %v2032, %v2039
        %v2042 = vunpack.c.l.s4 1934713408
        %v2043 = vunpack.c.0.s8 %v2042
        %v2044 = vperm.slane %v2038, %v2043
        %v2046 = vunpack.c.l.s4 1934713408
        %v2047 = vunpack.c.0.s8 %v2046
        %v2048 = vperm.slane %v2040, %v2047
        %v2049 = vrot.slane %v2036, 4
        %v2050 = vsel %vm874, %v2049, %v2024
        %v2051 = vrot.slane %v2024, 4
        %v2052 = vsel %vm874, %v2036, %v2051
        %v2054 = vunpack.c.l.s4 1934713408
        %v2055 = vunpack.c.0.s8 %v2054
        %v2056 = vperm.slane %v2050, %v2055
        %v2058 = vunpack.c.l.s4 1934713408
        %v2059 = vunpack.c.0.s8 %v2058
        %v2060 = vperm.slane %v2052, %v2059
        %v2061 = vrot.slane %v2044, 4
        %v2062 = vsel %vm874, 0.0, %v2061
        %v2063 = vrot.slane %v2048, 4
        %v2064 = vsel %vm874, 0.0, %v2063
        %v2065 = vrot.slane %v2056, 4
        %v2066 = vsel %vm874, 0.0, %v2065
        %v2067 = vrot.slane %v2060, 4
        %v2068 = vsel %vm874, 0.0, %v2067
        %v2069 = vsel %vm874, %v2063, %v2044
        %v2071 = vunpack.c.l.s4 1983009808
        %v2072 = vunpack.c.0.s8 %v2071
        %v2073 = vperm.slane %v2069, %v2072
        %v2074 = vrot.slane %v2064, 4
        %v2075 = vsel %vm874, %v2074, %v2062
        %v2077 = vunpack.c.l.s4 1983009808
        %v2078 = vunpack.c.0.s8 %v2077
        %v2079 = vperm.slane %v2075, %v2078
        %v2080 = vsel %vm874, %v2067, %v2056
        %v2082 = vunpack.c.l.s4 1983009808
        %v2083 = vunpack.c.0.s8 %v2082
        %v2084 = vperm.slane %v2080, %v2083
        %v2085 = vrot.slane %v2068, 4
        %v2086 = vsel %vm874, %v2085, %v2066
        %v2088 = vunpack.c.l.s4 1983009808
        %v2089 = vunpack.c.0.s8 %v2088
        %v2090 = vperm.slane %v2086, %v2089
        %v2091 = vrot.slane %v2079, 4
        %v2092 = vsel %vm874, %v2091, %v2073
        %v2093 = vrot.slane %v2073, 4
        %v2094 = vsel %vm874, %v2079, %v2093
        %v2096 = vunpack.c.l.s4 1934713408
        %v2097 = vunpack.c.0.s8 %v2096
        %v2098 = vperm.slane %v2092, %v2097
        %v2100 = vunpack.c.l.s4 1934713408
        %v2101 = vunpack.c.0.s8 %v2100
        %v2102 = vperm.slane %v2094, %v2101
        %v2103 = vrot.slane %v2090, 4
        %v2104 = vsel %vm874, %v2103, %v2084
        %v2105 = vrot.slane %v2084, 4
        %v2106 = vsel %vm874, %v2090, %v2105
        %v2108 = vunpack.c.l.s4 1934713408
        %v2109 = vunpack.c.0.s8 %v2108
        %v2110 = vperm.slane %v2104, %v2109
        %v2112 = vunpack.c.l.s4 1934713408
        %v2113 = vunpack.c.0.s8 %v2112
        %v2114 = vperm.slane %v2106, %v2113
        %v2115 = vrot.slane %v2110, 4
        %v2116 = vsel %vm874, %v2115, %v2098
        %v2117 = vrot.slane %v2098, 4
        %v2118 = vsel %vm874, %v2110, %v2117
        %v2119 = vrot.slane %v2114, 4
        %v2120 = vsel %vm874, %v2119, %v2102
        %v2121 = vrot.slane %v2102, 4
        %v2122 = vsel %vm874, %v2114, %v2121
        %v2124 = vsel %vm1226, %v1867, 0
        %v2127 = vsel %vm1226, %v1987, 0
        %2129 = vmatpush.xpose.msra.mxu0 0.0
        %2130 = vmatpush.xpose.msra.mxu0 0.0
        %2131 = vmatpush.xpose.msra.mxu0 0.0
        %2132 = vmatpush.xpose.msra.mxu0 0.0
        %2133 = vmatpush.xpose.msra.mxu0 0.0
        %2134 = vmatpush.xpose.msra.mxu0 0.0
        %2135 = vmatpush.xpose.msra.mxu0 0.0
        %2136 = vmatpush.xpose.msra.mxu0 0.0
        %2137 = vmatpush.xpose.msra.mxu0 0.0
        %2138 = vmatpush.xpose.msra.mxu0 0.0
        %2139 = vmatpush.xpose.msra.mxu0 0.0
        %2140 = vmatpush.xpose.msra.mxu0 0.0
        %2141 = vmatpush.xpose.msra.mxu0 0.0
        %2142 = vmatpush.xpose.msra.mxu0 0.0
        %2143 = vmatpush.xpose.msra.mxu0 0.0
        %2144 = vmatpush.xpose.msra.mxu0 %v2127
        %2145 = vmatmul.f32.gmra.mxu0 %v2124
        %v2146 = vpop.f32.mrf.mxu0
        %v2147 = vadd.f32 0.0, %v2146
        %2148 = vdwg.mxu0
        %v2150 = vsel %vm1226, %v1869, 0
        %v2153 = vsel %vm1226, %v1989, 0
        %2155 = vmatpush.xpose.msra.mxu0 0.0
        %2156 = vmatpush.xpose.msra.mxu0 0.0
        %2157 = vmatpush.xpose.msra.mxu0 0.0
        %2158 = vmatpush.xpose.msra.mxu0 0.0
        %2159 = vmatpush.xpose.msra.mxu0 0.0
        %2160 = vmatpush.xpose.msra.mxu0 0.0
        %2161 = vmatpush.xpose.msra.mxu0 0.0
        %2162 = vmatpush.xpose.msra.mxu0 0.0
        %2163 = vmatpush.xpose.msra.mxu0 0.0
        %2164 = vmatpush.xpose.msra.mxu0 0.0
        %2165 = vmatpush.xpose.msra.mxu0 0.0
        %2166 = vmatpush.xpose.msra.mxu0 0.0
        %2167 = vmatpush.xpose.msra.mxu0 0.0
        %2168 = vmatpush.xpose.msra.mxu0 0.0
        %2169 = vmatpush.xpose.msra.mxu0 0.0
        %2170 = vmatpush.xpose.msra.mxu0 %v2153
        %2171 = vmatmul.f32.gmra.mxu0 %v2150
        %v2172 = vpop.f32.mrf.mxu0
        %v2173 = vadd.f32 0.0, %v2172
        %2174 = vdwg.mxu0
        %v2176 = vsel %vm1226, %v1871, 0
        %v2179 = vsel %vm1226, %v1991, 0
        %2181 = vmatpush.xpose.msra.mxu0 0.0
        %2182 = vmatpush.xpose.msra.mxu0 0.0
        %2183 = vmatpush.xpose.msra.mxu0 0.0
        %2184 = vmatpush.xpose.msra.mxu0 0.0
        %2185 = vmatpush.xpose.msra.mxu0 0.0
        %2186 = vmatpush.xpose.msra.mxu0 0.0
        %2187 = vmatpush.xpose.msra.mxu0 0.0
        %2188 = vmatpush.xpose.msra.mxu0 0.0
        %2189 = vmatpush.xpose.msra.mxu0 0.0
        %2190 = vmatpush.xpose.msra.mxu0 0.0
        %2191 = vmatpush.xpose.msra.mxu0 0.0
        %2192 = vmatpush.xpose.msra.mxu0 0.0
        %2193 = vmatpush.xpose.msra.mxu0 0.0
        %2194 = vmatpush.xpose.msra.mxu0 0.0
        %2195 = vmatpush.xpose.msra.mxu0 0.0
        %2196 = vmatpush.xpose.msra.mxu0 %v2179
        %2197 = vmatmul.f32.gmra.mxu0 %v2176
        %v2198 = vpop.f32.mrf.mxu0
        %v2199 = vadd.f32 0.0, %v2198
        %2200 = vdwg.mxu0
        %v2202 = vsel %vm1226, %v1873, 0
        %v2205 = vsel %vm1226, %v1993, 0
        %2207 = vmatpush.xpose.msra.mxu0 0.0
        %2208 = vmatpush.xpose.msra.mxu0 0.0
        %2209 = vmatpush.xpose.msra.mxu0 0.0
        %2210 = vmatpush.xpose.msra.mxu0 0.0
        %2211 = vmatpush.xpose.msra.mxu0 0.0
        %2212 = vmatpush.xpose.msra.mxu0 0.0
        %2213 = vmatpush.xpose.msra.mxu0 0.0
        %2214 = vmatpush.xpose.msra.mxu0 0.0
        %2215 = vmatpush.xpose.msra.mxu0 0.0
        %2216 = vmatpush.xpose.msra.mxu0 0.0
        %2217 = vmatpush.xpose.msra.mxu0 0.0
        %2218 = vmatpush.xpose.msra.mxu0 0.0
        %2219 = vmatpush.xpose.msra.mxu0 0.0
        %2220 = vmatpush.xpose.msra.mxu0 0.0
        %2221 = vmatpush.xpose.msra.mxu0 0.0
        %2222 = vmatpush.xpose.msra.mxu0 %v2205
        %2223 = vmatmul.f32.gmra.mxu0 %v2202
        %v2224 = vpop.f32.mrf.mxu0
        %v2225 = vadd.f32 0.0, %v2224
        %2226 = vdwg.mxu0
        %v2227 = vsel %vm1226, %v2147, -inf
        %2228 = vmax.xlane.f32.xlu0 %v2227
        %v2229 = vpop.xlane.xlu0 %2228
        %v2230 = vsel %vm1226, %v2173, -inf
        %2231 = vmax.xlane.f32.xlu0 %v2230
        %v2232 = vpop.xlane.xlu0 %2231
        %v2233 = vsel %vm1226, %v2199, -inf
        %2234 = vmax.xlane.f32.xlu0 %v2233
        %v2235 = vpop.xlane.xlu0 %2234
        %v2236 = vsel %vm1226, %v2225, -inf
        %2237 = vmax.xlane.f32.xlu0 %v2236
        %v2238 = vpop.xlane.xlu0 %2237
        %v2239 = vsub.f32 %v2147, %v2229
        %v2240 = vsub.f32 %v2173, %v2232
        %v2241 = vsub.f32 %v2199, %v2235
        %v2242 = vsub.f32 %v2225, %v2238
        %v2243 = vmul.f32 %v2239, 1.442695
        %v2244 = vpow.pop %v2243
        %v2245 = vmul.f32 %v2240, 1.442695
        %v2246 = vpow.pop %v2245
        %v2247 = vmul.f32 %v2241, 1.442695
        %v2248 = vpow.pop %v2247
        %v2249 = vmul.f32 %v2242, 1.442695
        %v2250 = vpow.pop %v2249
        %v2251 = vsel %vm1226, %v2244, 0.0
        %2252 = vadd.xlane.f32.xlu0 %v2251
        %v2253 = vpop.xlane.xlu0 %2252
        %v2254 = vsel %vm1226, %v2246, 0.0
        %2255 = vadd.xlane.f32.xlu0 %v2254
        %v2256 = vpop.xlane.xlu0 %2255
        %v2257 = vsel %vm1226, %v2248, 0.0
        %2258 = vadd.xlane.f32.xlu0 %v2257
        %v2259 = vpop.xlane.xlu0 %2258
        %v2260 = vsel %vm1226, %v2250, 0.0
        %2261 = vadd.xlane.f32.xlu0 %v2260
        %v2262 = vpop.xlane.xlu0 %2261
        %v2263 = vrcp.pop %v2253
        %v2264 = vmul.f32 %v2253, %v2263
        %v2265 = vsub.f32 1.0, %v2264
        %v2266 = vmul.f32 %v2263, %v2265
        %v2267 = vadd.f32 %v2263, %v2266
        %vm2268 = vweird.f32 %v2253
        %vm2269 = vweird.f32 %v2263
        %vm2270 = vmor %vm2268, %vm2269
        %v2271 = vsel %vm2270, %v2263, %v2267
        %v2272 = vand.u32 2147483647, %v2253
        %vm2273 = vcmp.eq.f32.partialorder %v2272, 8.507059e+37
        %v2274 = vand.u32 %v2253, 2147483648
        %v2275 = vor.u32 1.1754944e-38, %v2274
        %v2276 = vsel %vm2273, %v2275, %v2271
        %v2277 = vmul.f32 %v2244, %v2276
        %v2278 = vrcp.pop %v2256
        %v2279 = vmul.f32 %v2256, %v2278
        %v2280 = vsub.f32 1.0, %v2279
        %v2281 = vmul.f32 %v2278, %v2280
        %v2282 = vadd.f32 %v2278, %v2281
        %vm2283 = vweird.f32 %v2256
        %vm2284 = vweird.f32 %v2278
        %vm2285 = vmor %vm2283, %vm2284
        %v2286 = vsel %vm2285, %v2278, %v2282
        %v2287 = vand.u32 2147483647, %v2256
        %vm2288 = vcmp.eq.f32.partialorder %v2287, 8.507059e+37
        %v2289 = vand.u32 %v2256, 2147483648
        %v2290 = vor.u32 1.1754944e-38, %v2289
        %v2291 = vsel %vm2288, %v2290, %v2286
        %v2292 = vmul.f32 %v2246, %v2291
        %v2293 = vrcp.pop %v2259
        %v2294 = vmul.f32 %v2259, %v2293
        %v2295 = vsub.f32 1.0, %v2294
        %v2296 = vmul.f32 %v2293, %v2295
        %v2297 = vadd.f32 %v2293, %v2296
        %vm2298 = vweird.f32 %v2259
        %vm2299 = vweird.f32 %v2293
        %vm2300 = vmor %vm2298, %vm2299
        %v2301 = vsel %vm2300, %v2293, %v2297
        %v2302 = vand.u32 2147483647, %v2259
        %vm2303 = vcmp.eq.f32.partialorder %v2302, 8.507059e+37
        %v2304 = vand.u32 %v2259, 2147483648
        %v2305 = vor.u32 1.1754944e-38, %v2304
        %v2306 = vsel %vm2303, %v2305, %v2301
        %v2307 = vmul.f32 %v2248, %v2306
        %v2308 = vrcp.pop %v2262
        %v2309 = vmul.f32 %v2262, %v2308
        %v2310 = vsub.f32 1.0, %v2309
        %v2311 = vmul.f32 %v2308, %v2310
        %v2312 = vadd.f32 %v2308, %v2311
        %vm2313 = vweird.f32 %v2262
        %vm2314 = vweird.f32 %v2308
        %vm2315 = vmor %vm2313, %vm2314
        %v2316 = vsel %vm2315, %v2308, %v2312
        %v2317 = vand.u32 2147483647, %v2262
        %vm2318 = vcmp.eq.f32.partialorder %v2317, 8.507059e+37
        %v2319 = vand.u32 %v2262, 2147483648
        %v2320 = vor.u32 1.1754944e-38, %v2319
        %v2321 = vsel %vm2318, %v2320, %v2316
        %v2322 = vmul.f32 %v2250, %v2321
        %v2324 = vsel %vm1226, %v2277, 0
        %2326 = vmatpush.msra.mxu0 0.0
        %2327 = vmatpush.msra.mxu0 0.0
        %2328 = vmatpush.msra.mxu0 0.0
        %2329 = vmatpush.msra.mxu0 0.0
        %2330 = vmatpush.msra.mxu0 0.0
        %2331 = vmatpush.msra.mxu0 0.0
        %2332 = vmatpush.msra.mxu0 0.0
        %2333 = vmatpush.msra.mxu0 0.0
        %2334 = vmatpush.msra.mxu0 0.0
        %2335 = vmatpush.msra.mxu0 0.0
        %2336 = vmatpush.msra.mxu0 0.0
        %2337 = vmatpush.msra.mxu0 0.0
        %2338 = vmatpush.msra.mxu0 0.0
        %2339 = vmatpush.msra.mxu0 0.0
        %2340 = vmatpush.msra.mxu0 0.0
        %2341 = vmatpush.msra.mxu0 %v2116
        %2342 = vmatmul.f32.gmra.mxu0 %v2324
        %v2343 = vpop.f32.mrf.mxu0
        %v2344 = vadd.f32 0.0, %v2343
        %2345 = vdwg.mxu0
        %v2347 = vsel %vm1226, %v2292, 0
        %2349 = vmatpush.msra.mxu0 0.0
        %2350 = vmatpush.msra.mxu0 0.0
        %2351 = vmatpush.msra.mxu0 0.0
        %2352 = vmatpush.msra.mxu0 0.0
        %2353 = vmatpush.msra.mxu0 0.0
        %2354 = vmatpush.msra.mxu0 0.0
        %2355 = vmatpush.msra.mxu0 0.0
        %2356 = vmatpush.msra.mxu0 0.0
        %2357 = vmatpush.msra.mxu0 0.0
        %2358 = vmatpush.msra.mxu0 0.0
        %2359 = vmatpush.msra.mxu0 0.0
        %2360 = vmatpush.msra.mxu0 0.0
        %2361 = vmatpush.msra.mxu0 0.0
        %2362 = vmatpush.msra.mxu0 0.0
        %2363 = vmatpush.msra.mxu0 0.0
        %2364 = vmatpush.msra.mxu0 %v2118
        %2365 = vmatmul.f32.gmra.mxu0 %v2347
        %v2366 = vpop.f32.mrf.mxu0
        %v2367 = vadd.f32 0.0, %v2366
        %2368 = vdwg.mxu0
        %v2370 = vsel %vm1226, %v2307, 0
        %2372 = vmatpush.msra.mxu0 0.0
        %2373 = vmatpush.msra.mxu0 0.0
        %2374 = vmatpush.msra.mxu0 0.0
        %2375 = vmatpush.msra.mxu0 0.0
        %2376 = vmatpush.msra.mxu0 0.0
        %2377 = vmatpush.msra.mxu0 0.0
        %2378 = vmatpush.msra.mxu0 0.0
        %2379 = vmatpush.msra.mxu0 0.0
        %2380 = vmatpush.msra.mxu0 0.0
        %2381 = vmatpush.msra.mxu0 0.0
        %2382 = vmatpush.msra.mxu0 0.0
        %2383 = vmatpush.msra.mxu0 0.0
        %2384 = vmatpush.msra.mxu0 0.0
        %2385 = vmatpush.msra.mxu0 0.0
        %2386 = vmatpush.msra.mxu0 0.0
        %2387 = vmatpush.msra.mxu0 %v2120
        %2388 = vmatmul.f32.gmra.mxu0 %v2370
        %v2389 = vpop.f32.mrf.mxu0
        %v2390 = vadd.f32 0.0, %v2389
        %2391 = vdwg.mxu0
        %v2393 = vsel %vm1226, %v2322, 0
        %2395 = vmatpush.msra.mxu0 0.0
        %2396 = vmatpush.msra.mxu0 0.0
        %2397 = vmatpush.msra.mxu0 0.0
        %2398 = vmatpush.msra.mxu0 0.0
        %2399 = vmatpush.msra.mxu0 0.0
        %2400 = vmatpush.msra.mxu0 0.0
        %2401 = vmatpush.msra.mxu0 0.0
        %2402 = vmatpush.msra.mxu0 0.0
        %2403 = vmatpush.msra.mxu0 0.0
        %2404 = vmatpush.msra.mxu0 0.0
        %2405 = vmatpush.msra.mxu0 0.0
        %2406 = vmatpush.msra.mxu0 0.0
        %2407 = vmatpush.msra.mxu0 0.0
        %2408 = vmatpush.msra.mxu0 0.0
        %2409 = vmatpush.msra.mxu0 0.0
        %2410 = vmatpush.msra.mxu0 %v2122
        %2411 = vmatmul.f32.gmra.mxu0 %v2393
        %v2412 = vpop.f32.mrf.mxu0
        %v2413 = vadd.f32 0.0, %v2412
        %2414 = vdwg.mxu0
        %v2415 = vsel %vm1226, %v2277, 0.0
        %v2416 = vsel %vm1226, %v2292, 0.0
        %v2417 = vadd.f32 %v2415, %v2416
        %v2418 = vsel %vm1226, %v2307, 0.0
        %v2419 = vadd.f32 %v2417, %v2418
        %v2420 = vsel %vm1226, %v2322, 0.0
        %v2421 = vadd.f32 %v2419, %v2420
        %v2422 = vmul.f32 %v2421, %v1532
        %v2423 = vrot.slane %v2390, 4
        %v2424 = vsel %vm874, %v2423, %v2344
        %v2425 = vrot.slane %v2344, 4
        %v2426 = vsel %vm874, %v2390, %v2425
        %v2428 = vunpack.c.l.s4 1983009808
        %v2429 = vunpack.c.0.s8 %v2428
        %v2430 = vperm.slane %v2424, %v2429
        %v2432 = vunpack.c.l.s4 1983009808
        %v2433 = vunpack.c.0.s8 %v2432
        %v2434 = vperm.slane %v2426, %v2433
        %v2435 = vrot.slane %v2413, 4
        %v2436 = vsel %vm874, %v2435, %v2367
        %v2437 = vrot.slane %v2367, 4
        %v2438 = vsel %vm874, %v2413, %v2437
        %v2440 = vunpack.c.l.s4 1983009808
        %v2441 = vunpack.c.0.s8 %v2440
        %v2442 = vperm.slane %v2436, %v2441
        %v2444 = vunpack.c.l.s4 1983009808
        %v2445 = vunpack.c.0.s8 %v2444
        %v2446 = vperm.slane %v2438, %v2445
        %v2447 = vrot.slane %v2442, 4
        %v2448 = vsel %vm874, %v2447, %v2430
        %v2449 = vrot.slane %v2430, 4
        %v2450 = vsel %vm874, %v2442, %v2449
        %v2452 = vunpack.c.l.s4 1934713408
        %v2453 = vunpack.c.0.s8 %v2452
        %v2454 = vperm.slane %v2448, %v2453
        %v2456 = vunpack.c.l.s4 1934713408
        %v2457 = vunpack.c.0.s8 %v2456
        %v2458 = vperm.slane %v2450, %v2457
        %v2459 = vrot.slane %v2446, 4
        %v2460 = vsel %vm874, %v2459, %v2434
        %v2461 = vrot.slane %v2434, 4
        %v2462 = vsel %vm874, %v2446, %v2461
        %v2464 = vunpack.c.l.s4 1934713408
        %v2465 = vunpack.c.0.s8 %v2464
        %v2466 = vperm.slane %v2460, %v2465
        %v2468 = vunpack.c.l.s4 1934713408
        %v2469 = vunpack.c.0.s8 %v2468
        %v2470 = vperm.slane %v2462, %v2469
        %v2471 = vrot.slane %v2454, 4
        %v2472 = vsel %vm874, 0.0, %v2471
        %v2473 = vrot.slane %v2458, 4
        %v2474 = vsel %vm874, 0.0, %v2473
        %v2475 = vrot.slane %v2466, 4
        %v2476 = vsel %vm874, 0.0, %v2475
        %v2477 = vrot.slane %v2470, 4
        %v2478 = vsel %vm874, 0.0, %v2477
        %v2479 = vsel %vm874, %v2473, %v2454
        %v2481 = vunpack.c.l.s4 1983009808
        %v2482 = vunpack.c.0.s8 %v2481
        %v2483 = vperm.slane %v2479, %v2482
        %v2484 = vrot.slane %v2474, 4
        %v2485 = vsel %vm874, %v2484, %v2472
        %v2487 = vunpack.c.l.s4 1983009808
        %v2488 = vunpack.c.0.s8 %v2487
        %v2489 = vperm.slane %v2485, %v2488
        %v2490 = vsel %vm874, %v2477, %v2466
        %v2492 = vunpack.c.l.s4 1983009808
        %v2493 = vunpack.c.0.s8 %v2492
        %v2494 = vperm.slane %v2490, %v2493
        %v2495 = vrot.slane %v2478, 4
        %v2496 = vsel %vm874, %v2495, %v2476
        %v2498 = vunpack.c.l.s4 1983009808
        %v2499 = vunpack.c.0.s8 %v2498
        %v2500 = vperm.slane %v2496, %v2499
        %v2501 = vrot.slane %v2489, 4
        %v2502 = vsel %vm874, %v2501, %v2483
        %v2503 = vrot.slane %v2483, 4
        %v2504 = vsel %vm874, %v2489, %v2503
        %v2506 = vunpack.c.l.s4 1934713408
        %v2507 = vunpack.c.0.s8 %v2506
        %v2508 = vperm.slane %v2502, %v2507
        %v2510 = vunpack.c.l.s4 1934713408
        %v2511 = vunpack.c.0.s8 %v2510
        %v2512 = vperm.slane %v2504, %v2511
        %v2513 = vrot.slane %v2500, 4
        %v2514 = vsel %vm874, %v2513, %v2494
        %v2515 = vrot.slane %v2494, 4
        %v2516 = vsel %vm874, %v2500, %v2515
        %v2518 = vunpack.c.l.s4 1934713408
        %v2519 = vunpack.c.0.s8 %v2518
        %v2520 = vperm.slane %v2514, %v2519
        %v2522 = vunpack.c.l.s4 1934713408
        %v2523 = vunpack.c.0.s8 %v2522
        %v2524 = vperm.slane %v2516, %v2523
        %v2525 = vrot.slane %v2520, 4
        %v2526 = vsel %vm874, %v2525, %v2508
        %v2527 = vrot.slane %v2508, 4
        %v2528 = vsel %vm874, %v2520, %v2527
        %v2529 = vrot.slane %v2524, 4
        %v2530 = vsel %vm874, %v2529, %v2512
        %v2531 = vrot.slane %v2512, 4
        %v2532 = vsel %vm874, %v2524, %v2531
        %2534 = vrot.lane.b32.xlu0 %v2528, 8
        %v2535 = vpop.permute.xlu0 %2534
        %2538 = vrot.lane.b32.xlu0 %v2530, 16
        %v2539 = vpop.permute.xlu0 %2538
        %2542 = vrot.lane.b32.xlu0 %v2532, 24
        %v2543 = vpop.permute.xlu0 %2542
        %v2545 = vsel %vm1226, %v2526, %v2535
        %v2546 = vsel %vm1657, %v2545, %v2539
        %v2547 = vsel %vm1659, %v2546, %v2543
        %v2548 = vld [vmem:[#allocation16] sm:$0xff]
        %v2549 = vld [vmem:[#allocation16 + $0x8] sm:$0xff]
        %v2550 = vld [vmem:[#allocation16 + $0x10] sm:$0xff]
        %v2551 = vld [vmem:[#allocation16 + $0x18] sm:$0xff]
        %v2552 = vld [vmem:[%s14] sm:$0x1]
        %v2554 = vperm.slane %v2552, 0
        %v2557 = vsel %vm807, %v2547, 0
        %2559 = vmatpush.msra.mxu0 0.0
        %2560 = vmatpush.msra.mxu0 0.0
        %2561 = vmatpush.msra.mxu0 0.0
        %2562 = vmatpush.msra.mxu0 0.0
        %2563 = vmatpush.msra.mxu0 0.0
        %2564 = vmatpush.msra.mxu0 0.0
        %2565 = vmatpush.msra.mxu0 0.0
        %2566 = vmatpush.msra.mxu0 0.0
        %2567 = vmatpush.msra.mxu0 0.0
        %2568 = vmatpush.msra.mxu0 0.0
        %2569 = vmatpush.msra.mxu0 0.0
        %2570 = vmatpush.msra.mxu0 0.0
        %2571 = vmatpush.msra.mxu0 %v2551
        %2572 = vmatpush.msra.mxu0 %v2550
        %2573 = vmatpush.msra.mxu0 %v2549
        %2574 = vmatpush.msra.mxu0 %v2548
        %2575 = vmatmul.f32.gmra.mxu0 %v2557
        %v2576 = vpop.f32.mrf.mxu0
        %v2577 = vadd.f32 %v2554, %v2576
        %2578 = vdwg.mxu0
        %2579 = vst.msk [vmem:[%s773] sm:$0xff] %vm807, %v2577
        %2580 = vst.msk [vmem:[%s794] sm:$0xff] %vm1226, %v2422
        %s2581 = sand.u32 %s386, 1
        %s2582 = scalar_lea.sflag [#allocation4], %s2581
        %s2583 = sand.u32 %s386, 1
        %s2584 = smul.addr %s2583, 8
        %s2585 = scalar_lea.vmem [#allocation17], %s2584
        %s2586 = sand.u32 %s48, 1
        %s2587 = scalar_lea.sflag [#allocation19], %s2586
        %s2588 = sand.u32 %s412, 1
        %s2589 = smul.addr %s2588, 8
        %s2590 = scalar_lea.vmem [#allocation18], %s2589
        %s2591 = sand.u32 %s48, 1
        %s2592 = scalar_lea.sflag [#allocation19], %s2591
        %s2593 = sand.u32 %s438, 1
        %s2594 = smul.addr %s2593, 8
        %s2595 = scalar_lea.vmem [#allocation20], %s2594
        %s2596 = sand.u32 %s464, 1
        %s2597 = scalar_lea.sflag [#allocation22], %s2596
        %s2598 = sand.u32 %s464, 1
        %s2599 = smul.addr %s2598, 8
        %s2600 = scalar_lea.vmem [#allocation21], %s2599
        // Predicated region
        $region117: #{tpu_custom_call.1} parent=79 // pred_check
          %p2601 = pneg %p396
        $region118: #{tpu_custom_call.1} parent=79 // pred_check_branch
          %2603 = sbr.rel (%p2601) target = $region120
        $region119: #{tpu_custom_call.1} parent=79 // pred_region
          %2605 = vsyncadd %s2582, 0
          %s2606 = smul.addr %s48, 8
          %s2607 = scalar_lea.hbm %s15, %s2606
          %s2609 = sshll.u32 %s2585, 4
          %s2610 = int_to_ptr.vmem [resolvable:$true] %s2609
          %s2611 = sshll.u32 %s2607, 4
          %s2612 = int_to_ptr.hbm [resolvable:$true] %s2611
          %2614 = dma.vmem_to_hbm [thread:$0]  %s2610, 128, %s2612, %s2582
        $region120: #{tpu_custom_call.1} parent=79 // pred_fallthru
          _
        // Predicated region
        $region121: #{tpu_custom_call.1} parent=79 // pred_check
          %p2615 = pneg %p422
        $region122: #{tpu_custom_call.1} parent=79 // pred_check_branch
          %2617 = sbr.rel (%p2615) target = $region124
        $region123: #{tpu_custom_call.1} parent=79 // pred_region
          %2619 = vsyncadd %s2587, 0
          %s2620 = smul.addr %s48, 8
          %s2621 = scalar_lea.hbm %s16, %s2620
          %s2623 = sshll.u32 %s2590, 4
          %s2624 = int_to_ptr.vmem [resolvable:$true] %s2623
          %s2625 = sshll.u32 %s2621, 4
          %s2626 = int_to_ptr.hbm [resolvable:$true] %s2625
          %2628 = dma.vmem_to_hbm [thread:$0]  %s2624, 128, %s2626, %s2587
        $region124: #{tpu_custom_call.1} parent=79 // pred_fallthru
          _
        // Predicated region
        $region125: #{tpu_custom_call.1} parent=79 // pred_check
          %p2629 = pneg %p448
        $region126: #{tpu_custom_call.1} parent=79 // pred_check_branch
          %2631 = sbr.rel (%p2629) target = $region128
        $region127: #{tpu_custom_call.1} parent=79 // pred_region
          %2633 = vsyncadd %s2592, 0
          %s2634 = smul.addr %s48, 8
          %s2635 = scalar_lea.hbm %s17, %s2634
          %s2637 = sshll.u32 %s2595, 4
          %s2638 = int_to_ptr.vmem [resolvable:$true] %s2637
          %s2639 = sshll.u32 %s2635, 4
          %s2640 = int_to_ptr.hbm [resolvable:$true] %s2639
          %2642 = dma.vmem_to_hbm [thread:$0]  %s2638, 128, %s2640, %s2592
        $region128: #{tpu_custom_call.1} parent=79 // pred_fallthru
          _
        // Predicated region
        $region129: #{tpu_custom_call.1} parent=79 // pred_check
          %p2643 = pneg %p474
        $region130: #{tpu_custom_call.1} parent=79 // pred_check_branch
          %2645 = sbr.rel (%p2643) target = $region132
        $region131: #{tpu_custom_call.1} parent=79 // pred_region
          %2647 = vsyncadd %s2597, 0
          %s2648 = smul.addr %s48, 8
          %s2649 = scalar_lea.hbm %s18, %s2648
          %s2651 = sshll.u32 %s2600, 4
          %s2652 = int_to_ptr.vmem [resolvable:$true] %s2651
          %s2653 = sshll.u32 %s2649, 4
          %s2654 = int_to_ptr.hbm [resolvable:$true] %s2653
          %2656 = dma.vmem_to_hbm [thread:$0]  %s2652, 128, %s2654, %s2597
        $region132: #{tpu_custom_call.1} parent=79 // pred_fallthru
          _
      $region80: #{tpu_custom_call.1} parent=5 // pred_fallthru
        _
      %p2657 = scmp.le.s32.totalorder 2, %s43
      // Predicated region
      $region133: #{tpu_custom_call.1} parent=5 // pred_check
        %p2658 = pneg %p2657
      $region134: #{tpu_custom_call.1} parent=5 // pred_check_branch
        %2660 = sbr.rel (%p2658) target = $region136
      $region135: #{tpu_custom_call.1} parent=5 // pred_region
        %s2661 = ssub.s32 %s43, 2
        // Predicated region
        $region137: #{tpu_custom_call.1} parent=135 // pred_check
          %p2662 = pneg %p402
        $region138: #{tpu_custom_call.1} parent=135 // pred_check_branch
          %2664 = sbr.rel (%p2662) target = $region140
        $region139: #{tpu_custom_call.1} parent=135 // pred_region
          %s2665 = sand.u32 %s387, 1
          %s2666 = scalar_lea.sflag [#allocation4], %s2665
          %s2667 = sand.u32 %s387, 1
          %s2668 = smul.addr %s2667, 8
          %s2669 = scalar_lea.vmem [#allocation17], %s2668
          %2671 = dma.done %s2666, 128
        $region140: #{tpu_custom_call.1} parent=135 // pred_fallthru
          _
        // Predicated region
        $region141: #{tpu_custom_call.1} parent=135 // pred_check
          %p2672 = pneg %p428
        $region142: #{tpu_custom_call.1} parent=135 // pred_check_branch
          %2674 = sbr.rel (%p2672) target = $region144
        $region143: #{tpu_custom_call.1} parent=135 // pred_region
          %s2675 = sand.u32 %s49, 1
          %s2676 = scalar_lea.sflag [#allocation19], %s2675
          %s2677 = sand.u32 %s413, 1
          %s2678 = smul.addr %s2677, 8
          %s2679 = scalar_lea.vmem [#allocation18], %s2678
          %2681 = dma.done %s2676, 128
        $region144: #{tpu_custom_call.1} parent=135 // pred_fallthru
          _
        // Predicated region
        $region145: #{tpu_custom_call.1} parent=135 // pred_check
          %p2682 = pneg %p454
        $region146: #{tpu_custom_call.1} parent=135 // pred_check_branch
          %2684 = sbr.rel (%p2682) target = $region148
        $region147: #{tpu_custom_call.1} parent=135 // pred_region
          %s2685 = sand.u32 %s49, 1
          %s2686 = scalar_lea.sflag [#allocation19], %s2685
          %s2687 = sand.u32 %s439, 1
          %s2688 = smul.addr %s2687, 8
          %s2689 = scalar_lea.vmem [#allocation20], %s2688
          %2691 = dma.done %s2686, 128
        $region148: #{tpu_custom_call.1} parent=135 // pred_fallthru
          _
        // Predicated region
        $region149: #{tpu_custom_call.1} parent=135 // pred_check
          %p2692 = pneg %p480
        $region150: #{tpu_custom_call.1} parent=135 // pred_check_branch
          %2694 = sbr.rel (%p2692) target = $region152
        $region151: #{tpu_custom_call.1} parent=135 // pred_region
          %s2695 = sand.u32 %s465, 1
          %s2696 = scalar_lea.sflag [#allocation22], %s2695
          %s2697 = sand.u32 %s465, 1
          %s2698 = smul.addr %s2697, 8
          %s2699 = scalar_lea.vmem [#allocation21], %s2698
          %2701 = dma.done %s2696, 128
        $region152: #{tpu_custom_call.1} parent=135 // pred_fallthru
          _
      $region136: #{tpu_custom_call.1} parent=5 // pred_fallthru
        _
    $region6: #{tpu_custom_call.1} parent=1 // loop_footer
      %s47 = sadd.s32 1, %s43
    $region7: #{tpu_custom_call.1} parent=1 // loop_footer_branch
      %42 = sbr.rel target = $region3
    $region8: #{tpu_custom_call.1} parent=1 // loop_exit
      _
    %2702 = vsyncpa [#allocation3], 1
    %s2703 = scalar_lea.sflag [#allocation3], 1
    %2704 = vsyncpa %s2703, 1
    %2705 = vsyncpa [#allocation6], 1
    %s2706 = scalar_lea.sflag [#allocation6], 1
    %2707 = vsyncpa %s2706, 1
    %2708 = vsyncpa [#allocation9], 1
    %2709 = vsyncpa [#allocation12], 1
    %2710 = vsyncpa [#allocation15], 1
    %2711 = vsyncpa [#allocation4], 1
    %s2712 = scalar_lea.sflag [#allocation4], 1
    %2713 = vsyncpa %s2712, 1
    %2714 = vsyncpa [#allocation19], 1
    %s2715 = scalar_lea.sflag [#allocation19], 1
    %2716 = vsyncpa %s2715, 1
    %2717 = vsyncpa [#allocation22], 1
    %s2718 = scalar_lea.sflag [#allocation22], 1
    %2719 = vsyncpa %s2718, 1

</llo_original>
